<compile_context>
chip_gen: v7x
topology: tpu7x:2x2x1
jax: 0.10.0
libtpu: 0.0.40
codegen_flags: <defaults>
</compile_context>

<pallas_src>
import functools
import math

import jax
import jax.numpy as jnp
from jax import lax
from jax.experimental import pallas as pl
from jax.experimental.pallas import tpu as pltpu


# ----------------------------------------------------------------------------
# Pallas kernel: fused  x1 + conv3x3(x1 * x2) + bias  for one batch element
# ----------------------------------------------------------------------------
def _fam_kernel(x1_ref, x2_ref, w_ref, b_ref, o_ref, *, C, H, W):
    # x1_ref, x2_ref : (1, C, H*W)  lane-dense activations
    # w_ref          : (C, 9*C)     conv weight, rows = Cout, cols ordered (ky, kx, cin)
    # b_ref          : (C, 1)       conv bias
    # o_ref          : (1, C, H*W)
    HW = H * W
    x1 = x1_ref[0]                      # (C, HW)
    x2 = x2_ref[0]                      # (C, HW)
    x = x1 * x2                         # merge input (elementwise product)

    # SAME zero padding for the 3x3 conv, built in-kernel.
    # Row padding is done in flattened (row-major) form: prepend/append W zeros.
    zeros_row = jnp.zeros((C, W), x.dtype)
    xh = jnp.concatenate([zeros_row, x, zeros_row], axis=1)    # (C, (H+2)*W)
    xs = xh.reshape(C, H + 2, W)
    zeros_col = jnp.zeros((C, H + 2, 1), x.dtype)
    xp = jnp.concatenate([zeros_col, xs, zeros_col], axis=2)   # (C, H+2, W+2)

    # Tap-fused patch matrix: K = 9*C rows, H*W lane-dense columns.
    taps = [xp[:, ky:ky + H, kx:kx + W].reshape(C, HW)
            for ky in range(3) for kx in range(3)]
    patches = jnp.concatenate(taps, axis=0)                    # (9*C, HW)

    # Single MXU matmul: (Cout, 9*Cin) @ (9*Cin, HW) -> (Cout, HW)
    conv = jnp.dot(w_ref[...], patches, preferred_element_type=jnp.float32)
    conv = conv + b_ref[...]                                   # bias broadcast over lanes

    # Residual: out = x1 + merge(x1 * x2); lane-dense (256-wide) unmasked store.
    o_ref[0] = (x1 + conv).astype(o_ref.dtype)


# ----------------------------------------------------------------------------
# Wrapper
# ----------------------------------------------------------------------------
def fam_forward(x1, x2, w, b):
    """FAM forward. x1, x2: (N, C, H, W) NCHW; w: (C, C, 3, 3) OIHW; b: (C,)."""
    N, C, H, W = x1.shape
    HW = H * W
    # Contiguous merges -> effectively free at the XLA level; give 256-wide lanes.
    x1f = x1.reshape(N, C, HW)
    x2f = x2.reshape(N, C, HW)
    # (Cout, Cin, ky, kx) -> (Cout, ky, kx, Cin) -> (Cout, 9*Cin): matches kernel K order.
    w2d = jnp.transpose(w, (0, 2, 3, 1)).reshape(C, 9 * C)
    b2d = b.reshape(C, 1)

    kernel = functools.partial(_fam_kernel, C=C, H=H, W=W)
    act_spec = pl.BlockSpec((1, C, HW), lambda n: (n, 0, 0))
    out = pl.pallas_call(
        kernel,
        out_shape=jax.ShapeDtypeStruct((N, C, HW), x1.dtype),
        grid=(N,),
        in_specs=[
            act_spec,                                   # x1
            act_spec,                                   # x2
            pl.BlockSpec((C, 9 * C), lambda n: (0, 0)),  # weight (constant block)
            pl.BlockSpec((C, 1), lambda n: (0, 0)),      # bias   (constant block)
        ],
        out_specs=act_spec,
        compiler_params=pltpu.CompilerParams(dimension_semantics=("parallel",)),
    )(x1f, x2f, w2d, b2d)
    return out.reshape(N, C, H, W)


# ----------------------------------------------------------------------------
# Pure-JAX reference (semantic check: PyTorch Conv2d(k=3, pad=1, bias) equivalent)
# ----------------------------------------------------------------------------
def _fam_ref(x1, x2, w, b):
    x = x1 * x2
    y = lax.conv_general_dilated(
        x, w, window_strides=(1, 1), padding="SAME",
        dimension_numbers=("NCHW", "OIHW", "NCHW"))
    return x1 + y + b.reshape(1, -1, 1, 1)


if __name__ == "__main__":
    N, C, H, W = 2, 4, 16, 16

    key = jax.random.PRNGKey(0)
    k1, k2, kw, kb = jax.random.split(key, 4)
    x1 = jax.random.normal(k1, (N, C, H, W), jnp.float32)        # PyTorch-style NCHW
    x2 = jax.random.normal(k2, (N, C, H, W), jnp.float32)
    w = (0.5 / math.sqrt(9 * C)) * jax.random.normal(kw, (C, C, 3, 3), jnp.float32)  # OIHW
    b = 0.1 * jax.random.normal(kb, (C,), jnp.float32)

    out = jax.jit(fam_forward)(x1, x2, w, b)
    out = jax.block_until_ready(out)

    ref = _fam_ref(x1, x2, w, b)
    assert out.shape == (N, C, H, W)
    assert bool(jnp.all(jnp.isfinite(out)))
    rel_err = float(jnp.max(jnp.abs(out - ref)) / (jnp.max(jnp.abs(ref)) + 1e-6))
    assert rel_err < 1e-2, f"mismatch vs reference, rel_err={rel_err}"

    print("KERNEL_OK")
</pallas_src>

<mosaic_0001>
module attributes {stable_mosaic.version = 11 : i64} {
  func.func @_fam_kernel(%arg0: i32, %arg1: memref<1x4x256xf32, #tpu.memory_space<vmem>>, %arg2: memref<1x4x256xf32, #tpu.memory_space<vmem>>, %arg3: memref<4x36xf32, #tpu.memory_space<vmem>>, %arg4: memref<4x1xf32, #tpu.memory_space<vmem>>, %arg5: memref<1x4x256xf32, #tpu.memory_space<vmem>>) attributes {dimension_semantics = [#tpu.dimension_semantics<parallel>], iteration_bounds = array<i64: 2>, scalar_prefetch = 0 : i64, scratch_operands = 0 : i64, tpu.core_type = #tpu.core_type<tc>, window_params = [{transform_indices = @transform_0, window_bounds = array<i64: 1, 4, 256>}, {transform_indices = @transform_1, window_bounds = array<i64: 1, 4, 256>}, {pipeline_mode = #tpu.pipeline_mode<synchronous>, transform_indices = @transform_2, window_bounds = array<i64: 4, 36>}, {pipeline_mode = #tpu.pipeline_mode<synchronous>, transform_indices = @transform_3, window_bounds = array<i64: 4, 1>}, {transform_indices = @transform_4, window_bounds = array<i64: 1, 4, 256>}]} {
    %c0 = arith.constant 0 : index
    %c0_0 = arith.constant 0 : index
    %c0_1 = arith.constant 0 : index
    %0 = vector.load %arg1[%c0, %c0_0, %c0_1] : memref<1x4x256xf32, #tpu.memory_space<vmem>>, vector<1x4x256xf32>
    %1 = vector.shape_cast %0 : vector<1x4x256xf32> to vector<4x256xf32>
    %c0_2 = arith.constant 0 : index
    %c0_3 = arith.constant 0 : index
    %c0_4 = arith.constant 0 : index
    %2 = vector.load %arg2[%c0_2, %c0_3, %c0_4] : memref<1x4x256xf32, #tpu.memory_space<vmem>>, vector<1x4x256xf32>
    %3 = vector.shape_cast %2 : vector<1x4x256xf32> to vector<4x256xf32>
    %4 = arith.mulf %1, %3 : vector<4x256xf32>
    %cst = arith.constant 0.000000e+00 : f32
    %5 = vector.broadcast %cst : f32 to vector<4x16xf32>
    %6 = tpu.concatenate %5, %4, %5 in 1 : vector<4x16xf32>, vector<4x256xf32>, vector<4x16xf32> -> vector<4x288xf32>
    %7 = vector.shape_cast %6 : vector<4x288xf32> to vector<4x18x16xf32>
    %cst_5 = arith.constant 0.000000e+00 : f32
    %8 = vector.broadcast %cst_5 : f32 to vector<4x18x1xf32>
    %9 = tpu.concatenate %8, %7, %8 in 2 : vector<4x18x1xf32>, vector<4x18x16xf32>, vector<4x18x1xf32> -> vector<4x18x18xf32>
    %10 = vector.extract_strided_slice %9 {offsets = [0, 0, 0], sizes = [4, 16, 16], strides = [1, 1, 1]} : vector<4x18x18xf32> to vector<4x16x16xf32>
    %11 = vector.shape_cast %10 : vector<4x16x16xf32> to vector<4x256xf32>
    %12 = vector.extract_strided_slice %9 {offsets = [0, 0, 1], sizes = [4, 16, 16], strides = [1, 1, 1]} : vector<4x18x18xf32> to vector<4x16x16xf32>
    %13 = vector.shape_cast %12 : vector<4x16x16xf32> to vector<4x256xf32>
    %14 = vector.extract_strided_slice %9 {offsets = [0, 0, 2], sizes = [4, 16, 16], strides = [1, 1, 1]} : vector<4x18x18xf32> to vector<4x16x16xf32>
    %15 = vector.shape_cast %14 : vector<4x16x16xf32> to vector<4x256xf32>
    %16 = vector.extract_strided_slice %9 {offsets = [0, 1, 0], sizes = [4, 16, 16], strides = [1, 1, 1]} : vector<4x18x18xf32> to vector<4x16x16xf32>
    %17 = vector.shape_cast %16 : vector<4x16x16xf32> to vector<4x256xf32>
    %18 = vector.extract_strided_slice %9 {offsets = [0, 1, 1], sizes = [4, 16, 16], strides = [1, 1, 1]} : vector<4x18x18xf32> to vector<4x16x16xf32>
    %19 = vector.shape_cast %18 : vector<4x16x16xf32> to vector<4x256xf32>
    %20 = vector.extract_strided_slice %9 {offsets = [0, 1, 2], sizes = [4, 16, 16], strides = [1, 1, 1]} : vector<4x18x18xf32> to vector<4x16x16xf32>
    %21 = vector.shape_cast %20 : vector<4x16x16xf32> to vector<4x256xf32>
    %22 = vector.extract_strided_slice %9 {offsets = [0, 2, 0], sizes = [4, 16, 16], strides = [1, 1, 1]} : vector<4x18x18xf32> to vector<4x16x16xf32>
    %23 = vector.shape_cast %22 : vector<4x16x16xf32> to vector<4x256xf32>
    %24 = vector.extract_strided_slice %9 {offsets = [0, 2, 1], sizes = [4, 16, 16], strides = [1, 1, 1]} : vector<4x18x18xf32> to vector<4x16x16xf32>
    %25 = vector.shape_cast %24 : vector<4x16x16xf32> to vector<4x256xf32>
    %26 = vector.extract_strided_slice %9 {offsets = [0, 2, 2], sizes = [4, 16, 16], strides = [1, 1, 1]} : vector<4x18x18xf32> to vector<4x16x16xf32>
    %27 = vector.shape_cast %26 : vector<4x16x16xf32> to vector<4x256xf32>
    %28 = tpu.concatenate %11, %13, %15, %17, %19, %21, %23, %25, %27 in 0 : vector<4x256xf32>, vector<4x256xf32>, vector<4x256xf32>, vector<4x256xf32>, vector<4x256xf32>, vector<4x256xf32>, vector<4x256xf32>, vector<4x256xf32>, vector<4x256xf32> -> vector<36x256xf32>
    %c0_6 = arith.constant 0 : index
    %c0_7 = arith.constant 0 : index
    %29 = vector.load %arg3[%c0_6, %c0_7] : memref<4x36xf32, #tpu.memory_space<vmem>>, vector<4x36xf32>
    %cst_8 = arith.constant dense<0.000000e+00> : vector<4x256xf32>
    %30 = tpu.matmul %29, %28, %cst_8 {dimension_numbers = #tpu.dot_dimension_numbers<[1], [0], [0], [1], [0, 0, 1, 1], [], []>} : vector<4x36xf32>, vector<36x256xf32>, vector<4x256xf32> -> vector<4x256xf32>
    %c0_9 = arith.constant 0 : index
    %c0_10 = arith.constant 0 : index
    %31 = vector.load %arg4[%c0_9, %c0_10] : memref<4x1xf32, #tpu.memory_space<vmem>>, vector<4x1xf32>
    %32 = vector.broadcast %31 : vector<4x1xf32> to vector<4x256xf32>
    %33 = arith.addf %30, %32 : vector<4x256xf32>
    %34 = arith.addf %1, %33 : vector<4x256xf32>
    %c0_11 = arith.constant 0 : index
    %c0_12 = arith.constant 0 : index
    %c0_13 = arith.constant 0 : index
    %35 = vector.load %arg5[%c0_11, %c0_12, %c0_13] : memref<1x4x256xf32, #tpu.memory_space<vmem>>, vector<1x4x256xf32>
    %36 = vector.shape_cast %35 : vector<1x4x256xf32> to vector<4x256xf32>
    %37 = vector.shape_cast %34 : vector<4x256xf32> to vector<1x4x256xf32>
    tpu.vector_store %arg5[%c0_11, %c0_12, %c0_13], %37 {strides = array<i32>} : memref<1x4x256xf32, #tpu.memory_space<vmem>>, vector<1x4x256xf32>,
    return
  }
  func.func @transform_0(%arg0: i32) -> (i32, i32, i32) {
    %c0_i32 = arith.constant 0 : i32
    %c0_i32_0 = arith.constant 0 : i32
    %c0_i32_1 = arith.constant 0 : i32
    return %arg0, %c0_i32, %c0_i32_0 : i32, i32, i32
  }
  func.func @transform_1(%arg0: i32) -> (i32, i32, i32) {
    %c0_i32 = arith.constant 0 : i32
    %c0_i32_0 = arith.constant 0 : i32
    %c0_i32_1 = arith.constant 0 : i32
    return %arg0, %c0_i32, %c0_i32_0 : i32, i32, i32
  }
  func.func @transform_2(%arg0: i32) -> (i32, i32) {
    %c0_i32 = arith.constant 0 : i32
    %c0_i32_0 = arith.constant 0 : i32
    %c0_i32_1 = arith.constant 0 : i32
    return %c0_i32, %c0_i32_0 : i32, i32
  }
  func.func @transform_3(%arg0: i32) -> (i32, i32) {
    %c0_i32 = arith.constant 0 : i32
    %c0_i32_0 = arith.constant 0 : i32
    %c0_i32_1 = arith.constant 0 : i32
    return %c0_i32, %c0_i32_0 : i32, i32
  }
  func.func @transform_4(%arg0: i32) -> (i32, i32, i32) {
    %c0_i32 = arith.constant 0 : i32
    %c0_i32_0 = arith.constant 0 : i32
    %c0_i32_1 = arith.constant 0 : i32
    return %arg0, %c0_i32, %c0_i32_0 : i32, i32, i32
  }
}

</mosaic_0001>

<llo_original>
// kernel: fam_forward.1
$region0: #{fam_forward.1}
  #allocation0 [shape = 'u32[]', space=smem, size = 0x4, offset = 0x4, fixed_abs, tag = 'smem constant byte address 0x4 - core index']
  #allocation1 [shape = 'u32[144,128]{1,0:T(1,128)}', space=vmem, size = 0x12000, scoped, tag = 'internal scratch']
  %s0 = inlined_call_operand.vmem [shape: f32[2,4,256], index: 0, kind: input, shape index: {}]
  %s1 = inlined_call_operand.vmem [shape: f32[2,4,256], index: 1, kind: input, shape index: {}]
  %s2 = inlined_call_operand.vmem [shape: f32[4,36], index: 2, kind: input, shape index: {}]
  %s3 = inlined_call_operand.vmem [shape: f32[4,1], index: 3, kind: input, shape index: {}]
  %s4 = inlined_call_operand.vmem [shape: f32[2,4,256], index: 4, kind: output, shape index: {}]
  %s5 = sld [smem:[#allocation0]]
  $region49: #{fam_forward.1} parent=0
    _
  %s7 = ssub.s32 1, %s5
  %s8 = scalar_select 0, %s7, %s5
  loop: start=0, step=1, limit=4
  $region2: #{fam_forward.1} parent=0 // loop_pre_header
    _
  $region3: #{fam_forward.1} parent=0 // loop_header
    %s10 = sphi 0, %s14
    %p11 = scmp.ge.s32.totalorder %s10, 4
    %s20 = sphi 0, %s22
    %s23 = sphi 0, %s20
    %s24 = sphi 0, %s23
    %s40 = sphi 0, %s24
    %s46 = sphi 0, %s48
    %s49 = sphi 0, %s46
    %s50 = sphi 0, %s49
    %s66 = sphi 0, %s50
    %s70 = sphi 0, %s70
    %s72 = sphi 0, %s70
    %s73 = sphi 0, %s72
    %s87 = sphi 0, %s73
    %s91 = sphi 0, %s91
    %s93 = sphi 0, %s91
    %s94 = sphi 0, %s93
    %s108 = sphi 0, %s94
    %s114 = sphi 0, %s116
    %s117 = sphi 0, %s114
    %s118 = sphi 0, %s117
    %s134 = sphi 0, %s118
  $region4: #{fam_forward.1} parent=0 // loop_header_branch
    %13 = sbr.rel (%p11) target = $region8
  $region5: #{fam_forward.1} parent=0 // loop_body
    %s15 = ssub.s32 %s10, 1
    %s16 = ssub.s32 %s10, 2
    %s17 = sadd.s32 %s10, 1
    %s18 = ssub.s32 %s10, %s17
    %p19 = scmp.eq.s32.totalorder %s18, 0
    %s21 = sadd.s32 %s20, 1
    %s22 = scalar_select %p19, %s20, %s21
    %p25 = pneg %p19
    %p26 = scmp.eq.s32.totalorder %s10, 1
    %p27 = por %p25, %p26
    %p28 = scmp.ne.s32.totalorder %s20, %s23
    %p29 = scmp.eq.s32.totalorder %s10, 0
    %p30 = por %p28, %p29
    %p31 = scmp.ne.s32.totalorder %s20, %s23
    %p32 = scmp.eq.s32.totalorder %s15, 1
    %p33 = por %p31, %p32
    %p34 = scmp.ne.s32.totalorder %s23, %s24
    %p35 = scmp.eq.s32.totalorder %s15, 0
    %p36 = por %p34, %p35
    %p37 = scmp.ne.s32.totalorder %s23, %s24
    %p38 = scmp.eq.s32.totalorder %s16, 1
    %p39 = por %p37, %p38
    %p41 = scmp.ne.s32.totalorder %s24, %s40
    %p42 = scmp.eq.s32.totalorder %s16, 0
    %p43 = por %p41, %p42
    %s44 = ssub.s32 %s10, %s17
    %p45 = scmp.eq.s32.totalorder %s44, 0
    %s47 = sadd.s32 %s46, 1
    %s48 = scalar_select %p45, %s46, %s47
    %p51 = pneg %p45
    %p52 = scmp.eq.s32.totalorder %s10, 1
    %p53 = por %p51, %p52
    %p54 = scmp.ne.s32.totalorder %s46, %s49
    %p55 = scmp.eq.s32.totalorder %s10, 0
    %p56 = por %p54, %p55
    %p57 = scmp.ne.s32.totalorder %s46, %s49
    %p58 = scmp.eq.s32.totalorder %s15, 1
    %p59 = por %p57, %p58
    %p60 = scmp.ne.s32.totalorder %s49, %s50
    %p61 = scmp.eq.s32.totalorder %s15, 0
    %p62 = por %p60, %p61
    %p63 = scmp.ne.s32.totalorder %s49, %s50
    %p64 = scmp.eq.s32.totalorder %s16, 1
    %p65 = por %p63, %p64
    %p67 = scmp.ne.s32.totalorder %s50, %s66
    %p68 = scmp.eq.s32.totalorder %s16, 0
    %p69 = por %p67, %p68
    %s71 = sadd.s32 %s70, 1
    %p74 = scmp.eq.s32.totalorder %s10, 1
    %p75 = scmp.ne.s32.totalorder %s70, %s72
    %p76 = scmp.eq.s32.totalorder %s10, 0
    %p77 = por %p75, %p76
    %p78 = scmp.ne.s32.totalorder %s70, %s72
    %p79 = scmp.eq.s32.totalorder %s15, 1
    %p80 = por %p78, %p79
    %p81 = scmp.ne.s32.totalorder %s72, %s73
    %p82 = scmp.eq.s32.totalorder %s15, 0
    %p83 = por %p81, %p82
    %p84 = scmp.ne.s32.totalorder %s72, %s73
    %p85 = scmp.eq.s32.totalorder %s16, 1
    %p86 = por %p84, %p85
    %p88 = scmp.ne.s32.totalorder %s73, %s87
    %p89 = scmp.eq.s32.totalorder %s16, 0
    %p90 = por %p88, %p89
    %s92 = sadd.s32 %s91, 1
    %p95 = scmp.eq.s32.totalorder %s10, 1
    %p96 = scmp.ne.s32.totalorder %s91, %s93
    %p97 = scmp.eq.s32.totalorder %s10, 0
    %p98 = por %p96, %p97
    %p99 = scmp.ne.s32.totalorder %s91, %s93
    %p100 = scmp.eq.s32.totalorder %s15, 1
    %p101 = por %p99, %p100
    %p102 = scmp.ne.s32.totalorder %s93, %s94
    %p103 = scmp.eq.s32.totalorder %s15, 0
    %p104 = por %p102, %p103
    %p105 = scmp.ne.s32.totalorder %s93, %s94
    %p106 = scmp.eq.s32.totalorder %s16, 1
    %p107 = por %p105, %p106
    %p109 = scmp.ne.s32.totalorder %s94, %s108
    %p110 = scmp.eq.s32.totalorder %s16, 0
    %p111 = por %p109, %p110
    %s112 = ssub.s32 %s10, %s17
    %p113 = scmp.eq.s32.totalorder %s112, 0
    %s115 = sadd.s32 %s114, 1
    %s116 = scalar_select %p113, %s114, %s115
    %p119 = pneg %p113
    %p120 = scmp.eq.s32.totalorder %s10, 1
    %p121 = por %p119, %p120
    %p122 = scmp.ne.s32.totalorder %s114, %s117
    %p123 = scmp.eq.s32.totalorder %s10, 0
    %p124 = por %p122, %p123
    %p125 = scmp.ne.s32.totalorder %s114, %s117
    %p126 = scmp.eq.s32.totalorder %s15, 1
    %p127 = por %p125, %p126
    %p128 = scmp.ne.s32.totalorder %s117, %s118
    %p129 = scmp.eq.s32.totalorder %s15, 0
    %p130 = por %p128, %p129
    %p131 = scmp.ne.s32.totalorder %s117, %s118
    %p132 = scmp.eq.s32.totalorder %s16, 1
    %p133 = por %p131, %p132
    %p135 = scmp.ne.s32.totalorder %s118, %s134
    %p136 = scmp.eq.s32.totalorder %s16, 0
    %p137 = por %p135, %p136
    %p138 = scmp.le.s32.totalorder 1, %s10
    %p139 = scmp.lt.s32.totalorder %s10, 3
    %p140 = pnand %p138, %p139
    %p141 = pneg %p140
    // Predicated region
    $region9: #{fam_forward.1} parent=5 // pred_check
      _
    $region10: #{fam_forward.1} parent=5 // pred_check_branch
      %143 = sbr.rel (%p140) target = $region12
    $region11: #{fam_forward.1} parent=5 // pred_region
      %s144 = ssub.s32 %s10, 1
      // Predicated region
      $region13: #{fam_forward.1} parent=11 // pred_check
        %p145 = pneg %p83
      $region14: #{fam_forward.1} parent=11 // pred_check_branch
        %147 = sbr.rel (%p145) target = $region16
      $region15: #{fam_forward.1} parent=11 // pred_region
        _
      $region16: #{fam_forward.1} parent=11 // pred_fallthru
        _
      // Predicated region
      $region17: #{fam_forward.1} parent=11 // pred_check
        %p148 = pneg %p104
      $region18: #{fam_forward.1} parent=11 // pred_check_branch
        %150 = sbr.rel (%p148) target = $region20
      $region19: #{fam_forward.1} parent=11 // pred_region
        _
      $region20: #{fam_forward.1} parent=11 // pred_fallthru
        _
    $region12: #{fam_forward.1} parent=5 // pred_fallthru
      _
    %p151 = scmp.lt.s32.totalorder %s10, 2
    // Predicated region
    $region21: #{fam_forward.1} parent=5 // pred_check
      %p152 = pneg %p151
    $region22: #{fam_forward.1} parent=5 // pred_check_branch
      %154 = sbr.rel (%p152) target = $region24
    $region23: #{fam_forward.1} parent=5 // pred_region
      // Predicated region
      $region25: #{fam_forward.1} parent=23 // pred_check
        %p155 = pneg %p30
      $region26: #{fam_forward.1} parent=23 // pred_check_branch
        %157 = sbr.rel (%p155) target = $region28
      $region27: #{fam_forward.1} parent=23 // pred_region
        %p158 = scmp.lt.s32.totalorder %s10, 1
        %s159 = scalar_select %p158, %s10, 1
        %s160 = smul.addr %s159, 2
        %s161 = smul.addr %s160, 4
        %s162 = scalar_lea.vmem %s0, %s161
      $region28: #{fam_forward.1} parent=23 // pred_fallthru
        _
      // Predicated region
      $region29: #{fam_forward.1} parent=23 // pred_check
        %p163 = pneg %p56
      $region30: #{fam_forward.1} parent=23 // pred_check_branch
        %165 = sbr.rel (%p163) target = $region32
      $region31: #{fam_forward.1} parent=23 // pred_region
        %p166 = scmp.lt.s32.totalorder %s10, 1
        %s167 = scalar_select %p166, %s10, 1
        %s168 = smul.addr %s167, 2
        %s169 = smul.addr %s168, 4
        %s170 = scalar_lea.vmem %s1, %s169
      $region32: #{fam_forward.1} parent=23 // pred_fallthru
        _
    $region24: #{fam_forward.1} parent=5 // pred_fallthru
      _
    %p171 = scmp.le.s32.totalorder 1, %s10
    %p172 = scmp.lt.s32.totalorder %s10, 3
    %p173 = pnand %p171, %p172
    %p174 = pneg %p173
    // Predicated region
    $region33: #{fam_forward.1} parent=5 // pred_check
      _
    $region34: #{fam_forward.1} parent=5 // pred_check_branch
      %176 = sbr.rel (%p173) target = $region36
    $region35: #{fam_forward.1} parent=5 // pred_region
      %s177 = ssub.s32 %s10, 1
      %p178 = scmp.lt.s32.totalorder %s15, 1
      %s179 = scalar_select %p178, %s15, 1
      %s180 = smul.addr %s179, 2
      %s181 = smul.addr %s180, 4
      %s182 = scalar_lea.vmem %s0, %s181
      %p183 = pneg %p36
      %p184 = pneg %p33
      %p185 = scmp.lt.s32.totalorder %s15, 1
      %s186 = scalar_select %p185, %s15, 1
      %s187 = smul.addr %s186, 2
      %s188 = smul.addr %s187, 4
      %s189 = scalar_lea.vmem %s1, %s188
      %p190 = pneg %p62
      %p191 = pneg %p59
      %p192 = pneg %p83
      %p193 = pneg %p80
      %p194 = pneg %p104
      %p195 = pneg %p101
      %p196 = pneg %p130
      %p197 = pneg %p127
      %p198 = scmp.lt.s32.totalorder %s15, 1
      %s199 = scalar_select %p198, %s15, 1
      %s200 = smul.addr %s199, 2
      %s201 = smul.addr %s200, 4
      %s202 = scalar_lea.vmem %s4, %s201
      %p203 = scmp.lt.s32.totalorder %s15, 1
      %s204 = scalar_select %p203, %s15, 1
      %s205 = smul.addr %s204, 2
      %s206 = smul.addr %s205, 4
      %s207 = scalar_lea.vmem %s0, %s206
      %p208 = scmp.lt.s32.totalorder %s15, 1
      %s209 = scalar_select %p208, %s15, 1
      %s210 = smul.addr %s209, 2
      %s211 = smul.addr %s210, 4
      %s212 = scalar_lea.vmem %s1, %s211
      %p213 = scmp.lt.s32.totalorder %s15, 1
      %s214 = scalar_select %p213, %s15, 1
      %s215 = smul.addr %s214, 2
      %s216 = smul.addr %s215, 4
      %s217 = scalar_lea.vmem %s4, %s216
      %v218 = vld [vmem:[%s207] sm:$0xff]
      %v219 = vld [vmem:[%s212] sm:$0xff]
      %v220 = vmul.f32 %v218, %v219
      %v222 = vcombine.high %v220, %v220
      %223 = vrot.lane.b32.xlu0 %v220, 16
      %v224 = vpop.permute.xlu0 %223
      %225 = vrot.lane.b32.xlu0 %v222, 16
      %v226 = vpop.permute.xlu0 %225
      %vm227 = vcmask 130048
      %v228 = vsel %vm227, %v224, %v226
      %v232 = vsel %vm227, 0.0, %v224
      %v233 = vsel %vm227, %v226, 0.0
      %235 = vrot.lane.b32.xlu0 %v232, 112
      %v236 = vpop.permute.xlu0 %235
      %238 = vrot.lane.b32.xlu0 %v232, 96
      %v239 = vpop.permute.xlu0 %238
      %241 = vrot.lane.b32.xlu0 %v232, 80
      %v242 = vpop.permute.xlu0 %241
      %244 = vrot.lane.b32.xlu0 %v232, 64
      %v245 = vpop.permute.xlu0 %244
      %247 = vrot.lane.b32.xlu0 %v232, 48
      %v248 = vpop.permute.xlu0 %247
      %250 = vrot.lane.b32.xlu0 %v232, 32
      %v251 = vpop.permute.xlu0 %250
      %253 = vrot.lane.b32.xlu0 %v232, 16
      %v254 = vpop.permute.xlu0 %253
      %256 = vrot.lane.b32.xlu0 %v228, 112
      %v257 = vpop.permute.xlu0 %256
      %259 = vrot.lane.b32.xlu0 %v228, 96
      %v260 = vpop.permute.xlu0 %259
      %262 = vrot.lane.b32.xlu0 %v228, 80
      %v263 = vpop.permute.xlu0 %262
      %265 = vrot.lane.b32.xlu0 %v228, 64
      %v266 = vpop.permute.xlu0 %265
      %268 = vrot.lane.b32.xlu0 %v228, 48
      %v269 = vpop.permute.xlu0 %268
      %271 = vrot.lane.b32.xlu0 %v228, 32
      %v272 = vpop.permute.xlu0 %271
      %274 = vrot.lane.b32.xlu0 %v228, 16
      %v275 = vpop.permute.xlu0 %274
      %278 = vrot.lane.b32.xlu0 %v233, 112
      %v279 = vpop.permute.xlu0 %278
      %v280 = vcombine.low %v232, %v239
      %v282 = vunpack.c.l.s4 1983009808
      %v283 = vunpack.c.0.s8 %v282
      %v284 = vlaneseq
      %v285 = vshrl.u32 %v284, 7
      %v286 = vsub.s32 %v283, %v285
      %v287 = vrot.slane %v280, %v286
      %v288 = vcombine.low %v236, %v242
      %v290 = vunpack.c.l.s4 1983009808
      %v291 = vunpack.c.0.s8 %v290
      %v292 = vlaneseq
      %v293 = vshrl.u32 %v292, 7
      %v294 = vsub.s32 %v291, %v293
      %v295 = vrot.slane %v288, %v294
      %v296 = vcombine.low %v245, %v251
      %v298 = vunpack.c.l.s4 1983009808
      %v299 = vunpack.c.0.s8 %v298
      %v300 = vlaneseq
      %v301 = vshrl.u32 %v300, 7
      %v302 = vsub.s32 %v299, %v301
      %v303 = vrot.slane %v296, %v302
      %v304 = vcombine.low %v248, %v254
      %v306 = vunpack.c.l.s4 1983009808
      %v307 = vunpack.c.0.s8 %v306
      %v308 = vlaneseq
      %v309 = vshrl.u32 %v308, 7
      %v310 = vsub.s32 %v307, %v309
      %v311 = vrot.slane %v304, %v310
      %v312 = vcombine.low %v287, %v295
      %v313 = vcombine.high %v287, %v295
      %v315 = vunpack.c.l.s4 1934713408
      %v316 = vunpack.c.0.s8 %v315
      %v317 = vlaneseq
      %v318 = vshrl.u32 %v317, 7
      %v319 = vsub.s32 %v316, %v318
      %v320 = vrot.slane %v312, %v319
      %v322 = vunpack.c.l.s4 1934713408
      %v323 = vunpack.c.0.s8 %v322
      %v324 = vlaneseq
      %v325 = vshrl.u32 %v324, 7
      %v326 = vsub.s32 %v323, %v325
      %v327 = vrot.slane %v313, %v326
      %v328 = vcombine.low %v303, %v311
      %v329 = vcombine.high %v303, %v311
      %v331 = vunpack.c.l.s4 1934713408
      %v332 = vunpack.c.0.s8 %v331
      %v333 = vlaneseq
      %v334 = vshrl.u32 %v333, 7
      %v335 = vsub.s32 %v332, %v334
      %v336 = vrot.slane %v328, %v335
      %v338 = vunpack.c.l.s4 1934713408
      %v339 = vunpack.c.0.s8 %v338
      %v340 = vlaneseq
      %v341 = vshrl.u32 %v340, 7
      %v342 = vsub.s32 %v339, %v341
      %v343 = vrot.slane %v329, %v342
      %v344 = vcombine.low %v320, %v336
      %v345 = vcombine.high %v320, %v336
      %v346 = vcombine.low %v327, %v343
      %v347 = vcombine.high %v327, %v343
      %v348 = vcombine.low %v228, %v260
      %v350 = vunpack.c.l.s4 1983009808
      %v351 = vunpack.c.0.s8 %v350
      %v352 = vlaneseq
      %v353 = vshrl.u32 %v352, 7
      %v354 = vsub.s32 %v351, %v353
      %v355 = vrot.slane %v348, %v354
      %v356 = vcombine.low %v257, %v263
      %v358 = vunpack.c.l.s4 1983009808
      %v359 = vunpack.c.0.s8 %v358
      %v360 = vlaneseq
      %v361 = vshrl.u32 %v360, 7
      %v362 = vsub.s32 %v359, %v361
      %v363 = vrot.slane %v356, %v362
      %v364 = vcombine.low %v266, %v272
      %v366 = vunpack.c.l.s4 1983009808
      %v367 = vunpack.c.0.s8 %v366
      %v368 = vlaneseq
      %v369 = vshrl.u32 %v368, 7
      %v370 = vsub.s32 %v367, %v369
      %v371 = vrot.slane %v364, %v370
      %v372 = vcombine.low %v269, %v275
      %v374 = vunpack.c.l.s4 1983009808
      %v375 = vunpack.c.0.s8 %v374
      %v376 = vlaneseq
      %v377 = vshrl.u32 %v376, 7
      %v378 = vsub.s32 %v375, %v377
      %v379 = vrot.slane %v372, %v378
      %v380 = vcombine.low %v355, %v363
      %v381 = vcombine.high %v355, %v363
      %v383 = vunpack.c.l.s4 1934713408
      %v384 = vunpack.c.0.s8 %v383
      %v385 = vlaneseq
      %v386 = vshrl.u32 %v385, 7
      %v387 = vsub.s32 %v384, %v386
      %v388 = vrot.slane %v380, %v387
      %v390 = vunpack.c.l.s4 1934713408
      %v391 = vunpack.c.0.s8 %v390
      %v392 = vlaneseq
      %v393 = vshrl.u32 %v392, 7
      %v394 = vsub.s32 %v391, %v393
      %v395 = vrot.slane %v381, %v394
      %v396 = vcombine.low %v371, %v379
      %v397 = vcombine.high %v371, %v379
      %v399 = vunpack.c.l.s4 1934713408
      %v400 = vunpack.c.0.s8 %v399
      %v401 = vlaneseq
      %v402 = vshrl.u32 %v401, 7
      %v403 = vsub.s32 %v400, %v402
      %v404 = vrot.slane %v396, %v403
      %v406 = vunpack.c.l.s4 1934713408
      %v407 = vunpack.c.0.s8 %v406
      %v408 = vlaneseq
      %v409 = vshrl.u32 %v408, 7
      %v410 = vsub.s32 %v407, %v409
      %v411 = vrot.slane %v397, %v410
      %v412 = vcombine.low %v388, %v404
      %v413 = vcombine.high %v388, %v404
      %v414 = vcombine.low %v395, %v411
      %v415 = vcombine.high %v395, %v411
      %v417 = vunpack.c.l.s4 1983009808
      %v418 = vunpack.c.0.s8 %v417
      %v419 = vlaneseq
      %v420 = vshrl.u32 %v419, 7
      %v421 = vsub.s32 %v418, %v420
      %v422 = vrot.slane %v233, %v421
      %v425 = vunpack.c.l.s4 1983009808
      %v426 = vunpack.c.0.s8 %v425
      %v427 = vlaneseq
      %v428 = vshrl.u32 %v427, 7
      %v429 = vsub.s32 %v426, %v428
      %v430 = vrot.slane %v279, %v429
      %v431 = vcombine.low %v422, %v430
      %v432 = vcombine.high %v422, %v430
      %v434 = vunpack.c.l.s4 1934713408
      %v435 = vunpack.c.0.s8 %v434
      %v436 = vlaneseq
      %v437 = vshrl.u32 %v436, 7
      %v438 = vsub.s32 %v435, %v437
      %v439 = vrot.slane %v431, %v438
      %v441 = vunpack.c.l.s4 1934713408
      %v442 = vunpack.c.0.s8 %v441
      %v443 = vlaneseq
      %v444 = vshrl.u32 %v443, 7
      %v445 = vsub.s32 %v442, %v444
      %v446 = vrot.slane %v432, %v445
      %v447 = vcombine.high %v439, 0.0
      %v448 = vcombine.high %v446, 0.0
      %461 = vrot.lane.b32.xlu0 %v344, 1
      %v462 = vpop.permute.xlu0 %461
      %463 = vrot.lane.b32.xlu0 %v412, 1
      %v464 = vpop.permute.xlu0 %463
      %465 = vrot.lane.b32.xlu0 %v439, 1
      %v466 = vpop.permute.xlu0 %465
      %467 = vrot.lane.b32.xlu0 %v345, 1
      %v468 = vpop.permute.xlu0 %467
      %469 = vrot.lane.b32.xlu0 %v413, 1
      %v470 = vpop.permute.xlu0 %469
      %471 = vrot.lane.b32.xlu0 %v447, 1
      %v472 = vpop.permute.xlu0 %471
      %473 = vrot.lane.b32.xlu0 %v346, 1
      %v474 = vpop.permute.xlu0 %473
      %475 = vrot.lane.b32.xlu0 %v414, 1
      %v476 = vpop.permute.xlu0 %475
      %477 = vrot.lane.b32.xlu0 %v446, 1
      %v478 = vpop.permute.xlu0 %477
      %479 = vrot.lane.b32.xlu0 %v347, 1
      %v480 = vpop.permute.xlu0 %479
      %481 = vrot.lane.b32.xlu0 %v415, 1
      %v482 = vpop.permute.xlu0 %481
      %483 = vrot.lane.b32.xlu0 %v448, 1
      %v484 = vpop.permute.xlu0 %483
      %vm497 = vcmask 7168
      %v498 = vsel %vm497, 0.0, %v462
      %v499 = vsel %vm497, 0.0, %v464
      %v500 = vsel %vm497, 0.0, %v466
      %v501 = vsel %vm497, 0.0, %v468
      %v502 = vsel %vm497, 0.0, %v470
      %v503 = vsel %vm497, 0.0, %v472
      %v504 = vsel %vm497, 0.0, %v474
      %v505 = vsel %vm497, 0.0, %v476
      %v506 = vsel %vm497, 0.0, %v478
      %v507 = vsel %vm497, 0.0, %v480
      %v508 = vsel %vm497, 0.0, %v482
      %v509 = vsel %vm497, 0.0, %v484
      %vm510 = vcmask 138240
      %v511 = vsel %vm510, %v498, 0.0
      %v512 = vsel %vm510, %v499, 0.0
      %v513 = vsel %vm510, %v500, 0.0
      %v514 = vsel %vm510, %v501, 0.0
      %v515 = vsel %vm510, %v502, 0.0
      %v516 = vsel %vm510, %v503, 0.0
      %v517 = vsel %vm510, %v504, 0.0
      %v518 = vsel %vm510, %v505, 0.0
      %v519 = vsel %vm510, %v506, 0.0
      %v520 = vsel %vm510, %v507, 0.0
      %v521 = vsel %vm510, %v508, 0.0
      %v522 = vsel %vm510, %v509, 0.0
      %v523 = vcombine.low %v511, %v517
      %v524 = vcombine.high %v511, %v517
      %v526 = vunpack.c.l.s4 1983009808
      %v527 = vunpack.c.0.s8 %v526
      %v528 = vlaneseq
      %v529 = vshrl.u32 %v528, 7
      %v530 = vsub.s32 %v527, %v529
      %v531 = vrot.slane %v523, %v530
      %v533 = vunpack.c.l.s4 1983009808
      %v534 = vunpack.c.0.s8 %v533
      %v535 = vlaneseq
      %v536 = vshrl.u32 %v535, 7
      %v537 = vsub.s32 %v534, %v536
      %v538 = vrot.slane %v524, %v537
      %v539 = vcombine.low %v514, %v520
      %v540 = vcombine.high %v514, %v520
      %v542 = vunpack.c.l.s4 1983009808
      %v543 = vunpack.c.0.s8 %v542
      %v544 = vlaneseq
      %v545 = vshrl.u32 %v544, 7
      %v546 = vsub.s32 %v543, %v545
      %v547 = vrot.slane %v539, %v546
      %v549 = vunpack.c.l.s4 1983009808
      %v550 = vunpack.c.0.s8 %v549
      %v551 = vlaneseq
      %v552 = vshrl.u32 %v551, 7
      %v553 = vsub.s32 %v550, %v552
      %v554 = vrot.slane %v540, %v553
      %v555 = vcombine.low %v531, %v547
      %v556 = vcombine.high %v531, %v547
      %v558 = vunpack.c.l.s4 1934713408
      %v559 = vunpack.c.0.s8 %v558
      %v560 = vlaneseq
      %v561 = vshrl.u32 %v560, 7
      %v562 = vsub.s32 %v559, %v561
      %v563 = vrot.slane %v555, %v562
      %v565 = vunpack.c.l.s4 1934713408
      %v566 = vunpack.c.0.s8 %v565
      %v567 = vlaneseq
      %v568 = vshrl.u32 %v567, 7
      %v569 = vsub.s32 %v566, %v568
      %v570 = vrot.slane %v556, %v569
      %v571 = vcombine.low %v538, %v554
      %v572 = vcombine.high %v538, %v554
      %v574 = vunpack.c.l.s4 1934713408
      %v575 = vunpack.c.0.s8 %v574
      %v576 = vlaneseq
      %v577 = vshrl.u32 %v576, 7
      %v578 = vsub.s32 %v575, %v577
      %v579 = vrot.slane %v571, %v578
      %v581 = vunpack.c.l.s4 1934713408
      %v582 = vunpack.c.0.s8 %v581
      %v583 = vlaneseq
      %v584 = vshrl.u32 %v583, 7
      %v585 = vsub.s32 %v582, %v584
      %v586 = vrot.slane %v572, %v585
      %v587 = vcombine.high %v563, 0.0
      %v588 = vcombine.high %v570, 0.0
      %v589 = vcombine.high %v579, 0.0
      %v590 = vcombine.high %v586, 0.0
      %v591 = vcombine.low %v512, %v518
      %v592 = vcombine.high %v512, %v518
      %v594 = vunpack.c.l.s4 1983009808
      %v595 = vunpack.c.0.s8 %v594
      %v596 = vlaneseq
      %v597 = vshrl.u32 %v596, 7
      %v598 = vsub.s32 %v595, %v597
      %v599 = vrot.slane %v591, %v598
      %v601 = vunpack.c.l.s4 1983009808
      %v602 = vunpack.c.0.s8 %v601
      %v603 = vlaneseq
      %v604 = vshrl.u32 %v603, 7
      %v605 = vsub.s32 %v602, %v604
      %v606 = vrot.slane %v592, %v605
      %v607 = vcombine.low %v515, %v521
      %v608 = vcombine.high %v515, %v521
      %v610 = vunpack.c.l.s4 1983009808
      %v611 = vunpack.c.0.s8 %v610
      %v612 = vlaneseq
      %v613 = vshrl.u32 %v612, 7
      %v614 = vsub.s32 %v611, %v613
      %v615 = vrot.slane %v607, %v614
      %v617 = vunpack.c.l.s4 1983009808
      %v618 = vunpack.c.0.s8 %v617
      %v619 = vlaneseq
      %v620 = vshrl.u32 %v619, 7
      %v621 = vsub.s32 %v618, %v620
      %v622 = vrot.slane %v608, %v621
      %v623 = vcombine.low %v599, %v615
      %v624 = vcombine.high %v599, %v615
      %v626 = vunpack.c.l.s4 1934713408
      %v627 = vunpack.c.0.s8 %v626
      %v628 = vlaneseq
      %v629 = vshrl.u32 %v628, 7
      %v630 = vsub.s32 %v627, %v629
      %v631 = vrot.slane %v623, %v630
      %v633 = vunpack.c.l.s4 1934713408
      %v634 = vunpack.c.0.s8 %v633
      %v635 = vlaneseq
      %v636 = vshrl.u32 %v635, 7
      %v637 = vsub.s32 %v634, %v636
      %v638 = vrot.slane %v624, %v637
      %v639 = vcombine.low %v606, %v622
      %v640 = vcombine.high %v606, %v622
      %v642 = vunpack.c.l.s4 1934713408
      %v643 = vunpack.c.0.s8 %v642
      %v644 = vlaneseq
      %v645 = vshrl.u32 %v644, 7
      %v646 = vsub.s32 %v643, %v645
      %v647 = vrot.slane %v639, %v646
      %v649 = vunpack.c.l.s4 1934713408
      %v650 = vunpack.c.0.s8 %v649
      %v651 = vlaneseq
      %v652 = vshrl.u32 %v651, 7
      %v653 = vsub.s32 %v650, %v652
      %v654 = vrot.slane %v640, %v653
      %v655 = vcombine.high %v631, 0.0
      %v656 = vcombine.high %v638, 0.0
      %v657 = vcombine.high %v647, 0.0
      %v658 = vcombine.high %v654, 0.0
      %660 = vrot.lane.b32.xlu0 %v587, 16
      %v661 = vpop.permute.xlu0 %660
      %664 = vrot.lane.b32.xlu0 %v570, 32
      %v665 = vpop.permute.xlu0 %664
      %668 = vrot.lane.b32.xlu0 %v588, 48
      %v669 = vpop.permute.xlu0 %668
      %672 = vrot.lane.b32.xlu0 %v579, 64
      %v673 = vpop.permute.xlu0 %672
      %676 = vrot.lane.b32.xlu0 %v589, 80
      %v677 = vpop.permute.xlu0 %676
      %680 = vrot.lane.b32.xlu0 %v586, 96
      %v681 = vpop.permute.xlu0 %680
      %684 = vrot.lane.b32.xlu0 %v590, 112
      %v685 = vpop.permute.xlu0 %684
      %688 = vrot.lane.b32.xlu0 %v655, 16
      %v689 = vpop.permute.xlu0 %688
      %692 = vrot.lane.b32.xlu0 %v638, 32
      %v693 = vpop.permute.xlu0 %692
      %696 = vrot.lane.b32.xlu0 %v656, 48
      %v697 = vpop.permute.xlu0 %696
      %700 = vrot.lane.b32.xlu0 %v647, 64
      %v701 = vpop.permute.xlu0 %700
      %704 = vrot.lane.b32.xlu0 %v657, 80
      %v705 = vpop.permute.xlu0 %704
      %708 = vrot.lane.b32.xlu0 %v654, 96
      %v709 = vpop.permute.xlu0 %708
      %712 = vrot.lane.b32.xlu0 %v658, 112
      %v713 = vpop.permute.xlu0 %712
      %v715 = vsel %vm227, %v563, %v661
      %vm716 = vcmask 261120
      %v717 = vsel %vm716, %v715, %v665
      %vm718 = vcmask 392192
      %v719 = vsel %vm718, %v717, %v669
      %vm720 = vcmask 523264
      %v721 = vsel %vm720, %v719, %v673
      %vm722 = vcmask 654336
      %v723 = vsel %vm722, %v721, %v677
      %vm724 = vcmask 785408
      %v725 = vsel %vm724, %v723, %v681
      %vm726 = vcmask 916480
      %v727 = vsel %vm726, %v725, %v685
      %v728 = vsel %vm227, %v631, %v689
      %v729 = vsel %vm716, %v728, %v693
      %v730 = vsel %vm718, %v729, %v697
      %v731 = vsel %vm720, %v730, %v701
      %v732 = vsel %vm722, %v731, %v705
      %v733 = vsel %vm724, %v732, %v709
      %v734 = vsel %vm726, %v733, %v713
      %743 = vrot.lane.b32.xlu0 %v511, 127
      %v744 = vpop.permute.xlu0 %743
      %745 = vrot.lane.b32.xlu0 %v512, 127
      %v746 = vpop.permute.xlu0 %745
      %747 = vrot.lane.b32.xlu0 %v514, 127
      %v748 = vpop.permute.xlu0 %747
      %749 = vrot.lane.b32.xlu0 %v515, 127
      %v750 = vpop.permute.xlu0 %749
      %751 = vrot.lane.b32.xlu0 %v517, 127
      %v752 = vpop.permute.xlu0 %751
      %753 = vrot.lane.b32.xlu0 %v518, 127
      %v754 = vpop.permute.xlu0 %753
      %755 = vrot.lane.b32.xlu0 %v520, 127
      %v756 = vpop.permute.xlu0 %755
      %757 = vrot.lane.b32.xlu0 %v521, 127
      %v758 = vpop.permute.xlu0 %757
      %v767 = vcombine.low %v744, %v752
      %v768 = vcombine.high %v744, %v752
      %v770 = vunpack.c.l.s4 1983009808
      %v771 = vunpack.c.0.s8 %v770
      %v772 = vlaneseq
      %v773 = vshrl.u32 %v772, 7
      %v774 = vsub.s32 %v771, %v773
      %v775 = vrot.slane %v767, %v774
      %v777 = vunpack.c.l.s4 1983009808
      %v778 = vunpack.c.0.s8 %v777
      %v779 = vlaneseq
      %v780 = vshrl.u32 %v779, 7
      %v781 = vsub.s32 %v778, %v780
      %v782 = vrot.slane %v768, %v781
      %v783 = vcombine.low %v748, %v756
      %v784 = vcombine.high %v748, %v756
      %v786 = vunpack.c.l.s4 1983009808
      %v787 = vunpack.c.0.s8 %v786
      %v788 = vlaneseq
      %v789 = vshrl.u32 %v788, 7
      %v790 = vsub.s32 %v787, %v789
      %v791 = vrot.slane %v783, %v790
      %v793 = vunpack.c.l.s4 1983009808
      %v794 = vunpack.c.0.s8 %v793
      %v795 = vlaneseq
      %v796 = vshrl.u32 %v795, 7
      %v797 = vsub.s32 %v794, %v796
      %v798 = vrot.slane %v784, %v797
      %v799 = vcombine.low %v775, %v791
      %v800 = vcombine.high %v775, %v791
      %v802 = vunpack.c.l.s4 1934713408
      %v803 = vunpack.c.0.s8 %v802
      %v804 = vlaneseq
      %v805 = vshrl.u32 %v804, 7
      %v806 = vsub.s32 %v803, %v805
      %v807 = vrot.slane %v799, %v806
      %v809 = vunpack.c.l.s4 1934713408
      %v810 = vunpack.c.0.s8 %v809
      %v811 = vlaneseq
      %v812 = vshrl.u32 %v811, 7
      %v813 = vsub.s32 %v810, %v812
      %v814 = vrot.slane %v800, %v813
      %v815 = vcombine.low %v782, %v798
      %v816 = vcombine.high %v782, %v798
      %v818 = vunpack.c.l.s4 1934713408
      %v819 = vunpack.c.0.s8 %v818
      %v820 = vlaneseq
      %v821 = vshrl.u32 %v820, 7
      %v822 = vsub.s32 %v819, %v821
      %v823 = vrot.slane %v815, %v822
      %v825 = vunpack.c.l.s4 1934713408
      %v826 = vunpack.c.0.s8 %v825
      %v827 = vlaneseq
      %v828 = vshrl.u32 %v827, 7
      %v829 = vsub.s32 %v826, %v828
      %v830 = vrot.slane %v816, %v829
      %v831 = vcombine.high %v807, 0.0
      %v832 = vcombine.high %v814, 0.0
      %v833 = vcombine.high %v823, 0.0
      %v834 = vcombine.high %v830, 0.0
      %v835 = vcombine.low %v746, %v754
      %v836 = vcombine.high %v746, %v754
      %v838 = vunpack.c.l.s4 1983009808
      %v839 = vunpack.c.0.s8 %v838
      %v840 = vlaneseq
      %v841 = vshrl.u32 %v840, 7
      %v842 = vsub.s32 %v839, %v841
      %v843 = vrot.slane %v835, %v842
      %v845 = vunpack.c.l.s4 1983009808
      %v846 = vunpack.c.0.s8 %v845
      %v847 = vlaneseq
      %v848 = vshrl.u32 %v847, 7
      %v849 = vsub.s32 %v846, %v848
      %v850 = vrot.slane %v836, %v849
      %v851 = vcombine.low %v750, %v758
      %v852 = vcombine.high %v750, %v758
      %v854 = vunpack.c.l.s4 1983009808
      %v855 = vunpack.c.0.s8 %v854
      %v856 = vlaneseq
      %v857 = vshrl.u32 %v856, 7
      %v858 = vsub.s32 %v855, %v857
      %v859 = vrot.slane %v851, %v858
      %v861 = vunpack.c.l.s4 1983009808
      %v862 = vunpack.c.0.s8 %v861
      %v863 = vlaneseq
      %v864 = vshrl.u32 %v863, 7
      %v865 = vsub.s32 %v862, %v864
      %v866 = vrot.slane %v852, %v865
      %v867 = vcombine.low %v843, %v859
      %v868 = vcombine.high %v843, %v859
      %v870 = vunpack.c.l.s4 1934713408
      %v871 = vunpack.c.0.s8 %v870
      %v872 = vlaneseq
      %v873 = vshrl.u32 %v872, 7
      %v874 = vsub.s32 %v871, %v873
      %v875 = vrot.slane %v867, %v874
      %v877 = vunpack.c.l.s4 1934713408
      %v878 = vunpack.c.0.s8 %v877
      %v879 = vlaneseq
      %v880 = vshrl.u32 %v879, 7
      %v881 = vsub.s32 %v878, %v880
      %v882 = vrot.slane %v868, %v881
      %v883 = vcombine.low %v850, %v866
      %v884 = vcombine.high %v850, %v866
      %v886 = vunpack.c.l.s4 1934713408
      %v887 = vunpack.c.0.s8 %v886
      %v888 = vlaneseq
      %v889 = vshrl.u32 %v888, 7
      %v890 = vsub.s32 %v887, %v889
      %v891 = vrot.slane %v883, %v890
      %v893 = vunpack.c.l.s4 1934713408
      %v894 = vunpack.c.0.s8 %v893
      %v895 = vlaneseq
      %v896 = vshrl.u32 %v895, 7
      %v897 = vsub.s32 %v894, %v896
      %v898 = vrot.slane %v884, %v897
      %v899 = vcombine.high %v875, 0.0
      %v900 = vcombine.high %v882, 0.0
      %v901 = vcombine.high %v891, 0.0
      %v902 = vcombine.high %v898, 0.0
      %904 = vrot.lane.b32.xlu0 %v831, 16
      %v905 = vpop.permute.xlu0 %904
      %908 = vrot.lane.b32.xlu0 %v814, 32
      %v909 = vpop.permute.xlu0 %908
      %912 = vrot.lane.b32.xlu0 %v832, 48
      %v913 = vpop.permute.xlu0 %912
      %916 = vrot.lane.b32.xlu0 %v823, 64
      %v917 = vpop.permute.xlu0 %916
      %920 = vrot.lane.b32.xlu0 %v833, 80
      %v921 = vpop.permute.xlu0 %920
      %924 = vrot.lane.b32.xlu0 %v830, 96
      %v925 = vpop.permute.xlu0 %924
      %928 = vrot.lane.b32.xlu0 %v834, 112
      %v929 = vpop.permute.xlu0 %928
      %932 = vrot.lane.b32.xlu0 %v899, 16
      %v933 = vpop.permute.xlu0 %932
      %936 = vrot.lane.b32.xlu0 %v882, 32
      %v937 = vpop.permute.xlu0 %936
      %940 = vrot.lane.b32.xlu0 %v900, 48
      %v941 = vpop.permute.xlu0 %940
      %944 = vrot.lane.b32.xlu0 %v891, 64
      %v945 = vpop.permute.xlu0 %944
      %948 = vrot.lane.b32.xlu0 %v901, 80
      %v949 = vpop.permute.xlu0 %948
      %952 = vrot.lane.b32.xlu0 %v898, 96
      %v953 = vpop.permute.xlu0 %952
      %956 = vrot.lane.b32.xlu0 %v902, 112
      %v957 = vpop.permute.xlu0 %956
      %v959 = vsel %vm227, %v807, %v905
      %v960 = vsel %vm716, %v959, %v909
      %v961 = vsel %vm718, %v960, %v913
      %v962 = vsel %vm720, %v961, %v917
      %v963 = vsel %vm722, %v962, %v921
      %v964 = vsel %vm724, %v963, %v925
      %v965 = vsel %vm726, %v964, %v929
      %v966 = vsel %vm227, %v875, %v933
      %v967 = vsel %vm716, %v966, %v937
      %v968 = vsel %vm718, %v967, %v941
      %v969 = vsel %vm720, %v968, %v945
      %v970 = vsel %vm722, %v969, %v949
      %v971 = vsel %vm724, %v970, %v953
      %v972 = vsel %vm726, %v971, %v957
      %973 = vrot.lane.b32.xlu0 %v511, 126
      %v974 = vpop.permute.xlu0 %973
      %975 = vrot.lane.b32.xlu0 %v512, 126
      %v976 = vpop.permute.xlu0 %975
      %977 = vrot.lane.b32.xlu0 %v514, 126
      %v978 = vpop.permute.xlu0 %977
      %979 = vrot.lane.b32.xlu0 %v515, 126
      %v980 = vpop.permute.xlu0 %979
      %981 = vrot.lane.b32.xlu0 %v517, 126
      %v982 = vpop.permute.xlu0 %981
      %983 = vrot.lane.b32.xlu0 %v518, 126
      %v984 = vpop.permute.xlu0 %983
      %985 = vrot.lane.b32.xlu0 %v520, 126
      %v986 = vpop.permute.xlu0 %985
      %987 = vrot.lane.b32.xlu0 %v521, 126
      %v988 = vpop.permute.xlu0 %987
      %v997 = vcombine.low %v974, %v982
      %v998 = vcombine.high %v974, %v982
      %v1000 = vunpack.c.l.s4 1983009808
      %v1001 = vunpack.c.0.s8 %v1000
      %v1002 = vlaneseq
      %v1003 = vshrl.u32 %v1002, 7
      %v1004 = vsub.s32 %v1001, %v1003
      %v1005 = vrot.slane %v997, %v1004
      %v1007 = vunpack.c.l.s4 1983009808
      %v1008 = vunpack.c.0.s8 %v1007
      %v1009 = vlaneseq
      %v1010 = vshrl.u32 %v1009, 7
      %v1011 = vsub.s32 %v1008, %v1010
      %v1012 = vrot.slane %v998, %v1011
      %v1013 = vcombine.low %v978, %v986
      %v1014 = vcombine.high %v978, %v986
      %v1016 = vunpack.c.l.s4 1983009808
      %v1017 = vunpack.c.0.s8 %v1016
      %v1018 = vlaneseq
      %v1019 = vshrl.u32 %v1018, 7
      %v1020 = vsub.s32 %v1017, %v1019
      %v1021 = vrot.slane %v1013, %v1020
      %v1023 = vunpack.c.l.s4 1983009808
      %v1024 = vunpack.c.0.s8 %v1023
      %v1025 = vlaneseq
      %v1026 = vshrl.u32 %v1025, 7
      %v1027 = vsub.s32 %v1024, %v1026
      %v1028 = vrot.slane %v1014, %v1027
      %v1029 = vcombine.low %v1005, %v1021
      %v1030 = vcombine.high %v1005, %v1021
      %v1032 = vunpack.c.l.s4 1934713408
      %v1033 = vunpack.c.0.s8 %v1032
      %v1034 = vlaneseq
      %v1035 = vshrl.u32 %v1034, 7
      %v1036 = vsub.s32 %v1033, %v1035
      %v1037 = vrot.slane %v1029, %v1036
      %v1039 = vunpack.c.l.s4 1934713408
      %v1040 = vunpack.c.0.s8 %v1039
      %v1041 = vlaneseq
      %v1042 = vshrl.u32 %v1041, 7
      %v1043 = vsub.s32 %v1040, %v1042
      %v1044 = vrot.slane %v1030, %v1043
      %v1045 = vcombine.low %v1012, %v1028
      %v1046 = vcombine.high %v1012, %v1028
      %v1048 = vunpack.c.l.s4 1934713408
      %v1049 = vunpack.c.0.s8 %v1048
      %v1050 = vlaneseq
      %v1051 = vshrl.u32 %v1050, 7
      %v1052 = vsub.s32 %v1049, %v1051
      %v1053 = vrot.slane %v1045, %v1052
      %v1055 = vunpack.c.l.s4 1934713408
      %v1056 = vunpack.c.0.s8 %v1055
      %v1057 = vlaneseq
      %v1058 = vshrl.u32 %v1057, 7
      %v1059 = vsub.s32 %v1056, %v1058
      %v1060 = vrot.slane %v1046, %v1059
      %v1061 = vcombine.high %v1037, 0.0
      %v1062 = vcombine.high %v1044, 0.0
      %v1063 = vcombine.high %v1053, 0.0
      %v1064 = vcombine.high %v1060, 0.0
      %v1065 = vcombine.low %v976, %v984
      %v1066 = vcombine.high %v976, %v984
      %v1068 = vunpack.c.l.s4 1983009808
      %v1069 = vunpack.c.0.s8 %v1068
      %v1070 = vlaneseq
      %v1071 = vshrl.u32 %v1070, 7
      %v1072 = vsub.s32 %v1069, %v1071
      %v1073 = vrot.slane %v1065, %v1072
      %v1075 = vunpack.c.l.s4 1983009808
      %v1076 = vunpack.c.0.s8 %v1075
      %v1077 = vlaneseq
      %v1078 = vshrl.u32 %v1077, 7
      %v1079 = vsub.s32 %v1076, %v1078
      %v1080 = vrot.slane %v1066, %v1079
      %v1081 = vcombine.low %v980, %v988
      %v1082 = vcombine.high %v980, %v988
      %v1084 = vunpack.c.l.s4 1983009808
      %v1085 = vunpack.c.0.s8 %v1084
      %v1086 = vlaneseq
      %v1087 = vshrl.u32 %v1086, 7
      %v1088 = vsub.s32 %v1085, %v1087
      %v1089 = vrot.slane %v1081, %v1088
      %v1091 = vunpack.c.l.s4 1983009808
      %v1092 = vunpack.c.0.s8 %v1091
      %v1093 = vlaneseq
      %v1094 = vshrl.u32 %v1093, 7
      %v1095 = vsub.s32 %v1092, %v1094
      %v1096 = vrot.slane %v1082, %v1095
      %v1097 = vcombine.low %v1073, %v1089
      %v1098 = vcombine.high %v1073, %v1089
      %v1100 = vunpack.c.l.s4 1934713408
      %v1101 = vunpack.c.0.s8 %v1100
      %v1102 = vlaneseq
      %v1103 = vshrl.u32 %v1102, 7
      %v1104 = vsub.s32 %v1101, %v1103
      %v1105 = vrot.slane %v1097, %v1104
      %v1107 = vunpack.c.l.s4 1934713408
      %v1108 = vunpack.c.0.s8 %v1107
      %v1109 = vlaneseq
      %v1110 = vshrl.u32 %v1109, 7
      %v1111 = vsub.s32 %v1108, %v1110
      %v1112 = vrot.slane %v1098, %v1111
      %v1113 = vcombine.low %v1080, %v1096
      %v1114 = vcombine.high %v1080, %v1096
      %v1116 = vunpack.c.l.s4 1934713408
      %v1117 = vunpack.c.0.s8 %v1116
      %v1118 = vlaneseq
      %v1119 = vshrl.u32 %v1118, 7
      %v1120 = vsub.s32 %v1117, %v1119
      %v1121 = vrot.slane %v1113, %v1120
      %v1123 = vunpack.c.l.s4 1934713408
      %v1124 = vunpack.c.0.s8 %v1123
      %v1125 = vlaneseq
      %v1126 = vshrl.u32 %v1125, 7
      %v1127 = vsub.s32 %v1124, %v1126
      %v1128 = vrot.slane %v1114, %v1127
      %v1129 = vcombine.high %v1105, 0.0
      %v1130 = vcombine.high %v1112, 0.0
      %v1131 = vcombine.high %v1121, 0.0
      %v1132 = vcombine.high %v1128, 0.0
      %1134 = vrot.lane.b32.xlu0 %v1061, 16
      %v1135 = vpop.permute.xlu0 %1134
      %1138 = vrot.lane.b32.xlu0 %v1044, 32
      %v1139 = vpop.permute.xlu0 %1138
      %1142 = vrot.lane.b32.xlu0 %v1062, 48
      %v1143 = vpop.permute.xlu0 %1142
      %1146 = vrot.lane.b32.xlu0 %v1053, 64
      %v1147 = vpop.permute.xlu0 %1146
      %1150 = vrot.lane.b32.xlu0 %v1063, 80
      %v1151 = vpop.permute.xlu0 %1150
      %1154 = vrot.lane.b32.xlu0 %v1060, 96
      %v1155 = vpop.permute.xlu0 %1154
      %1158 = vrot.lane.b32.xlu0 %v1064, 112
      %v1159 = vpop.permute.xlu0 %1158
      %1162 = vrot.lane.b32.xlu0 %v1129, 16
      %v1163 = vpop.permute.xlu0 %1162
      %1166 = vrot.lane.b32.xlu0 %v1112, 32
      %v1167 = vpop.permute.xlu0 %1166
      %1170 = vrot.lane.b32.xlu0 %v1130, 48
      %v1171 = vpop.permute.xlu0 %1170
      %1174 = vrot.lane.b32.xlu0 %v1121, 64
      %v1175 = vpop.permute.xlu0 %1174
      %1178 = vrot.lane.b32.xlu0 %v1131, 80
      %v1179 = vpop.permute.xlu0 %1178
      %1182 = vrot.lane.b32.xlu0 %v1128, 96
      %v1183 = vpop.permute.xlu0 %1182
      %1186 = vrot.lane.b32.xlu0 %v1132, 112
      %v1187 = vpop.permute.xlu0 %1186
      %v1189 = vsel %vm227, %v1037, %v1135
      %v1190 = vsel %vm716, %v1189, %v1139
      %v1191 = vsel %vm718, %v1190, %v1143
      %v1192 = vsel %vm720, %v1191, %v1147
      %v1193 = vsel %vm722, %v1192, %v1151
      %v1194 = vsel %vm724, %v1193, %v1155
      %v1195 = vsel %vm726, %v1194, %v1159
      %v1196 = vsel %vm227, %v1105, %v1163
      %v1197 = vsel %vm716, %v1196, %v1167
      %v1198 = vsel %vm718, %v1197, %v1171
      %v1199 = vsel %vm720, %v1198, %v1175
      %v1200 = vsel %vm722, %v1199, %v1179
      %v1201 = vsel %vm724, %v1200, %v1183
      %v1202 = vsel %vm726, %v1201, %v1187
      %vm1207 = vcmask 1046528
      %v1208 = vrot.slane %v511, 1
      %v1209 = vrot.slane %v512, 1
      %v1210 = vsel %vm1207, %v1208, %v1209
      %v1211 = vrot.slane %v513, 1
      %v1212 = vsel %vm1207, %v1209, %v1211
      %v1213 = vrot.slane %v514, 1
      %v1214 = vrot.slane %v515, 1
      %v1215 = vsel %vm1207, %v1213, %v1214
      %v1216 = vrot.slane %v516, 1
      %v1217 = vsel %vm1207, %v1214, %v1216
      %v1218 = vrot.slane %v517, 1
      %v1219 = vrot.slane %v518, 1
      %v1220 = vsel %vm1207, %v1218, %v1219
      %v1221 = vrot.slane %v519, 1
      %v1222 = vsel %vm1207, %v1219, %v1221
      %v1223 = vrot.slane %v520, 1
      %v1224 = vrot.slane %v521, 1
      %v1225 = vsel %vm1207, %v1223, %v1224
      %v1226 = vrot.slane %v522, 1
      %v1227 = vsel %vm1207, %v1224, %v1226
      %v1236 = vcombine.low %v1210, %v1220
      %v1237 = vcombine.high %v1210, %v1220
      %v1239 = vunpack.c.l.s4 1983009808
      %v1240 = vunpack.c.0.s8 %v1239
      %v1241 = vlaneseq
      %v1242 = vshrl.u32 %v1241, 7
      %v1243 = vsub.s32 %v1240, %v1242
      %v1244 = vrot.slane %v1236, %v1243
      %v1246 = vunpack.c.l.s4 1983009808
      %v1247 = vunpack.c.0.s8 %v1246
      %v1248 = vlaneseq
      %v1249 = vshrl.u32 %v1248, 7
      %v1250 = vsub.s32 %v1247, %v1249
      %v1251 = vrot.slane %v1237, %v1250
      %v1252 = vcombine.low %v1215, %v1225
      %v1253 = vcombine.high %v1215, %v1225
      %v1255 = vunpack.c.l.s4 1983009808
      %v1256 = vunpack.c.0.s8 %v1255
      %v1257 = vlaneseq
      %v1258 = vshrl.u32 %v1257, 7
      %v1259 = vsub.s32 %v1256, %v1258
      %v1260 = vrot.slane %v1252, %v1259
      %v1262 = vunpack.c.l.s4 1983009808
      %v1263 = vunpack.c.0.s8 %v1262
      %v1264 = vlaneseq
      %v1265 = vshrl.u32 %v1264, 7
      %v1266 = vsub.s32 %v1263, %v1265
      %v1267 = vrot.slane %v1253, %v1266
      %v1268 = vcombine.low %v1244, %v1260
      %v1269 = vcombine.high %v1244, %v1260
      %v1271 = vunpack.c.l.s4 1934713408
      %v1272 = vunpack.c.0.s8 %v1271
      %v1273 = vlaneseq
      %v1274 = vshrl.u32 %v1273, 7
      %v1275 = vsub.s32 %v1272, %v1274
      %v1276 = vrot.slane %v1268, %v1275
      %v1278 = vunpack.c.l.s4 1934713408
      %v1279 = vunpack.c.0.s8 %v1278
      %v1280 = vlaneseq
      %v1281 = vshrl.u32 %v1280, 7
      %v1282 = vsub.s32 %v1279, %v1281
      %v1283 = vrot.slane %v1269, %v1282
      %v1284 = vcombine.low %v1251, %v1267
      %v1285 = vcombine.high %v1251, %v1267
      %v1287 = vunpack.c.l.s4 1934713408
      %v1288 = vunpack.c.0.s8 %v1287
      %v1289 = vlaneseq
      %v1290 = vshrl.u32 %v1289, 7
      %v1291 = vsub.s32 %v1288, %v1290
      %v1292 = vrot.slane %v1284, %v1291
      %v1294 = vunpack.c.l.s4 1934713408
      %v1295 = vunpack.c.0.s8 %v1294
      %v1296 = vlaneseq
      %v1297 = vshrl.u32 %v1296, 7
      %v1298 = vsub.s32 %v1295, %v1297
      %v1299 = vrot.slane %v1285, %v1298
      %v1300 = vcombine.high %v1276, 0.0
      %v1301 = vcombine.high %v1283, 0.0
      %v1302 = vcombine.high %v1292, 0.0
      %v1303 = vcombine.high %v1299, 0.0
      %v1304 = vcombine.low %v1212, %v1222
      %v1305 = vcombine.high %v1212, %v1222
      %v1307 = vunpack.c.l.s4 1983009808
      %v1308 = vunpack.c.0.s8 %v1307
      %v1309 = vlaneseq
      %v1310 = vshrl.u32 %v1309, 7
      %v1311 = vsub.s32 %v1308, %v1310
      %v1312 = vrot.slane %v1304, %v1311
      %v1314 = vunpack.c.l.s4 1983009808
      %v1315 = vunpack.c.0.s8 %v1314
      %v1316 = vlaneseq
      %v1317 = vshrl.u32 %v1316, 7
      %v1318 = vsub.s32 %v1315, %v1317
      %v1319 = vrot.slane %v1305, %v1318
      %v1320 = vcombine.low %v1217, %v1227
      %v1321 = vcombine.high %v1217, %v1227
      %v1323 = vunpack.c.l.s4 1983009808
      %v1324 = vunpack.c.0.s8 %v1323
      %v1325 = vlaneseq
      %v1326 = vshrl.u32 %v1325, 7
      %v1327 = vsub.s32 %v1324, %v1326
      %v1328 = vrot.slane %v1320, %v1327
      %v1330 = vunpack.c.l.s4 1983009808
      %v1331 = vunpack.c.0.s8 %v1330
      %v1332 = vlaneseq
      %v1333 = vshrl.u32 %v1332, 7
      %v1334 = vsub.s32 %v1331, %v1333
      %v1335 = vrot.slane %v1321, %v1334
      %v1336 = vcombine.low %v1312, %v1328
      %v1337 = vcombine.high %v1312, %v1328
      %v1339 = vunpack.c.l.s4 1934713408
      %v1340 = vunpack.c.0.s8 %v1339
      %v1341 = vlaneseq
      %v1342 = vshrl.u32 %v1341, 7
      %v1343 = vsub.s32 %v1340, %v1342
      %v1344 = vrot.slane %v1336, %v1343
      %v1346 = vunpack.c.l.s4 1934713408
      %v1347 = vunpack.c.0.s8 %v1346
      %v1348 = vlaneseq
      %v1349 = vshrl.u32 %v1348, 7
      %v1350 = vsub.s32 %v1347, %v1349
      %v1351 = vrot.slane %v1337, %v1350
      %v1352 = vcombine.low %v1319, %v1335
      %v1353 = vcombine.high %v1319, %v1335
      %v1355 = vunpack.c.l.s4 1934713408
      %v1356 = vunpack.c.0.s8 %v1355
      %v1357 = vlaneseq
      %v1358 = vshrl.u32 %v1357, 7
      %v1359 = vsub.s32 %v1356, %v1358
      %v1360 = vrot.slane %v1352, %v1359
      %v1362 = vunpack.c.l.s4 1934713408
      %v1363 = vunpack.c.0.s8 %v1362
      %v1364 = vlaneseq
      %v1365 = vshrl.u32 %v1364, 7
      %v1366 = vsub.s32 %v1363, %v1365
      %v1367 = vrot.slane %v1353, %v1366
      %v1368 = vcombine.high %v1344, 0.0
      %v1369 = vcombine.high %v1351, 0.0
      %v1370 = vcombine.high %v1360, 0.0
      %v1371 = vcombine.high %v1367, 0.0
      %1373 = vrot.lane.b32.xlu0 %v1300, 16
      %v1374 = vpop.permute.xlu0 %1373
      %1377 = vrot.lane.b32.xlu0 %v1283, 32
      %v1378 = vpop.permute.xlu0 %1377
      %1381 = vrot.lane.b32.xlu0 %v1301, 48
      %v1382 = vpop.permute.xlu0 %1381
      %1385 = vrot.lane.b32.xlu0 %v1292, 64
      %v1386 = vpop.permute.xlu0 %1385
      %1389 = vrot.lane.b32.xlu0 %v1302, 80
      %v1390 = vpop.permute.xlu0 %1389
      %1393 = vrot.lane.b32.xlu0 %v1299, 96
      %v1394 = vpop.permute.xlu0 %1393
      %1397 = vrot.lane.b32.xlu0 %v1303, 112
      %v1398 = vpop.permute.xlu0 %1397
      %1401 = vrot.lane.b32.xlu0 %v1368, 16
      %v1402 = vpop.permute.xlu0 %1401
      %1405 = vrot.lane.b32.xlu0 %v1351, 32
      %v1406 = vpop.permute.xlu0 %1405
      %1409 = vrot.lane.b32.xlu0 %v1369, 48
      %v1410 = vpop.permute.xlu0 %1409
      %1413 = vrot.lane.b32.xlu0 %v1360, 64
      %v1414 = vpop.permute.xlu0 %1413
      %1417 = vrot.lane.b32.xlu0 %v1370, 80
      %v1418 = vpop.permute.xlu0 %1417
      %1421 = vrot.lane.b32.xlu0 %v1367, 96
      %v1422 = vpop.permute.xlu0 %1421
      %1425 = vrot.lane.b32.xlu0 %v1371, 112
      %v1426 = vpop.permute.xlu0 %1425
      %v1428 = vsel %vm227, %v1276, %v1374
      %v1429 = vsel %vm716, %v1428, %v1378
      %v1430 = vsel %vm718, %v1429, %v1382
      %v1431 = vsel %vm720, %v1430, %v1386
      %v1432 = vsel %vm722, %v1431, %v1390
      %v1433 = vsel %vm724, %v1432, %v1394
      %v1434 = vsel %vm726, %v1433, %v1398
      %v1435 = vsel %vm227, %v1344, %v1402
      %v1436 = vsel %vm716, %v1435, %v1406
      %v1437 = vsel %vm718, %v1436, %v1410
      %v1438 = vsel %vm720, %v1437, %v1414
      %v1439 = vsel %vm722, %v1438, %v1418
      %v1440 = vsel %vm724, %v1439, %v1422
      %v1441 = vsel %vm726, %v1440, %v1426
      %1442 = vrot.lane.b32.xlu0 %v1210, 127
      %v1443 = vpop.permute.xlu0 %1442
      %1444 = vrot.lane.b32.xlu0 %v1212, 127
      %v1445 = vpop.permute.xlu0 %1444
      %1446 = vrot.lane.b32.xlu0 %v1215, 127
      %v1447 = vpop.permute.xlu0 %1446
      %1448 = vrot.lane.b32.xlu0 %v1217, 127
      %v1449 = vpop.permute.xlu0 %1448
      %1450 = vrot.lane.b32.xlu0 %v1220, 127
      %v1451 = vpop.permute.xlu0 %1450
      %1452 = vrot.lane.b32.xlu0 %v1222, 127
      %v1453 = vpop.permute.xlu0 %1452
      %1454 = vrot.lane.b32.xlu0 %v1225, 127
      %v1455 = vpop.permute.xlu0 %1454
      %1456 = vrot.lane.b32.xlu0 %v1227, 127
      %v1457 = vpop.permute.xlu0 %1456
      %v1466 = vcombine.low %v1443, %v1451
      %v1467 = vcombine.high %v1443, %v1451
      %v1469 = vunpack.c.l.s4 1983009808
      %v1470 = vunpack.c.0.s8 %v1469
      %v1471 = vlaneseq
      %v1472 = vshrl.u32 %v1471, 7
      %v1473 = vsub.s32 %v1470, %v1472
      %v1474 = vrot.slane %v1466, %v1473
      %v1476 = vunpack.c.l.s4 1983009808
      %v1477 = vunpack.c.0.s8 %v1476
      %v1478 = vlaneseq
      %v1479 = vshrl.u32 %v1478, 7
      %v1480 = vsub.s32 %v1477, %v1479
      %v1481 = vrot.slane %v1467, %v1480
      %v1482 = vcombine.low %v1447, %v1455
      %v1483 = vcombine.high %v1447, %v1455
      %v1485 = vunpack.c.l.s4 1983009808
      %v1486 = vunpack.c.0.s8 %v1485
      %v1487 = vlaneseq
      %v1488 = vshrl.u32 %v1487, 7
      %v1489 = vsub.s32 %v1486, %v1488
      %v1490 = vrot.slane %v1482, %v1489
      %v1492 = vunpack.c.l.s4 1983009808
      %v1493 = vunpack.c.0.s8 %v1492
      %v1494 = vlaneseq
      %v1495 = vshrl.u32 %v1494, 7
      %v1496 = vsub.s32 %v1493, %v1495
      %v1497 = vrot.slane %v1483, %v1496
      %v1498 = vcombine.low %v1474, %v1490
      %v1499 = vcombine.high %v1474, %v1490
      %v1501 = vunpack.c.l.s4 1934713408
      %v1502 = vunpack.c.0.s8 %v1501
      %v1503 = vlaneseq
      %v1504 = vshrl.u32 %v1503, 7
      %v1505 = vsub.s32 %v1502, %v1504
      %v1506 = vrot.slane %v1498, %v1505
      %v1508 = vunpack.c.l.s4 1934713408
      %v1509 = vunpack.c.0.s8 %v1508
      %v1510 = vlaneseq
      %v1511 = vshrl.u32 %v1510, 7
      %v1512 = vsub.s32 %v1509, %v1511
      %v1513 = vrot.slane %v1499, %v1512
      %v1514 = vcombine.low %v1481, %v1497
      %v1515 = vcombine.high %v1481, %v1497
      %v1517 = vunpack.c.l.s4 1934713408
      %v1518 = vunpack.c.0.s8 %v1517
      %v1519 = vlaneseq
      %v1520 = vshrl.u32 %v1519, 7
      %v1521 = vsub.s32 %v1518, %v1520
      %v1522 = vrot.slane %v1514, %v1521
      %v1524 = vunpack.c.l.s4 1934713408
      %v1525 = vunpack.c.0.s8 %v1524
      %v1526 = vlaneseq
      %v1527 = vshrl.u32 %v1526, 7
      %v1528 = vsub.s32 %v1525, %v1527
      %v1529 = vrot.slane %v1515, %v1528
      %v1530 = vcombine.high %v1506, 0.0
      %v1531 = vcombine.high %v1513, 0.0
      %v1532 = vcombine.high %v1522, 0.0
      %v1533 = vcombine.high %v1529, 0.0
      %v1534 = vcombine.low %v1445, %v1453
      %v1535 = vcombine.high %v1445, %v1453
      %v1537 = vunpack.c.l.s4 1983009808
      %v1538 = vunpack.c.0.s8 %v1537
      %v1539 = vlaneseq
      %v1540 = vshrl.u32 %v1539, 7
      %v1541 = vsub.s32 %v1538, %v1540
      %v1542 = vrot.slane %v1534, %v1541
      %v1544 = vunpack.c.l.s4 1983009808
      %v1545 = vunpack.c.0.s8 %v1544
      %v1546 = vlaneseq
      %v1547 = vshrl.u32 %v1546, 7
      %v1548 = vsub.s32 %v1545, %v1547
      %v1549 = vrot.slane %v1535, %v1548
      %v1550 = vcombine.low %v1449, %v1457
      %v1551 = vcombine.high %v1449, %v1457
      %v1553 = vunpack.c.l.s4 1983009808
      %v1554 = vunpack.c.0.s8 %v1553
      %v1555 = vlaneseq
      %v1556 = vshrl.u32 %v1555, 7
      %v1557 = vsub.s32 %v1554, %v1556
      %v1558 = vrot.slane %v1550, %v1557
      %v1560 = vunpack.c.l.s4 1983009808
      %v1561 = vunpack.c.0.s8 %v1560
      %v1562 = vlaneseq
      %v1563 = vshrl.u32 %v1562, 7
      %v1564 = vsub.s32 %v1561, %v1563
      %v1565 = vrot.slane %v1551, %v1564
      %v1566 = vcombine.low %v1542, %v1558
      %v1567 = vcombine.high %v1542, %v1558
      %v1569 = vunpack.c.l.s4 1934713408
      %v1570 = vunpack.c.0.s8 %v1569
      %v1571 = vlaneseq
      %v1572 = vshrl.u32 %v1571, 7
      %v1573 = vsub.s32 %v1570, %v1572
      %v1574 = vrot.slane %v1566, %v1573
      %v1576 = vunpack.c.l.s4 1934713408
      %v1577 = vunpack.c.0.s8 %v1576
      %v1578 = vlaneseq
      %v1579 = vshrl.u32 %v1578, 7
      %v1580 = vsub.s32 %v1577, %v1579
      %v1581 = vrot.slane %v1567, %v1580
      %v1582 = vcombine.low %v1549, %v1565
      %v1583 = vcombine.high %v1549, %v1565
      %v1585 = vunpack.c.l.s4 1934713408
      %v1586 = vunpack.c.0.s8 %v1585
      %v1587 = vlaneseq
      %v1588 = vshrl.u32 %v1587, 7
      %v1589 = vsub.s32 %v1586, %v1588
      %v1590 = vrot.slane %v1582, %v1589
      %v1592 = vunpack.c.l.s4 1934713408
      %v1593 = vunpack.c.0.s8 %v1592
      %v1594 = vlaneseq
      %v1595 = vshrl.u32 %v1594, 7
      %v1596 = vsub.s32 %v1593, %v1595
      %v1597 = vrot.slane %v1583, %v1596
      %v1598 = vcombine.high %v1574, 0.0
      %v1599 = vcombine.high %v1581, 0.0
      %v1600 = vcombine.high %v1590, 0.0
      %v1601 = vcombine.high %v1597, 0.0
      %1603 = vrot.lane.b32.xlu0 %v1530, 16
      %v1604 = vpop.permute.xlu0 %1603
      %1607 = vrot.lane.b32.xlu0 %v1513, 32
      %v1608 = vpop.permute.xlu0 %1607
      %1611 = vrot.lane.b32.xlu0 %v1531, 48
      %v1612 = vpop.permute.xlu0 %1611
      %1615 = vrot.lane.b32.xlu0 %v1522, 64
      %v1616 = vpop.permute.xlu0 %1615
      %1619 = vrot.lane.b32.xlu0 %v1532, 80
      %v1620 = vpop.permute.xlu0 %1619
      %1623 = vrot.lane.b32.xlu0 %v1529, 96
      %v1624 = vpop.permute.xlu0 %1623
      %1627 = vrot.lane.b32.xlu0 %v1533, 112
      %v1628 = vpop.permute.xlu0 %1627
      %1631 = vrot.lane.b32.xlu0 %v1598, 16
      %v1632 = vpop.permute.xlu0 %1631
      %1635 = vrot.lane.b32.xlu0 %v1581, 32
      %v1636 = vpop.permute.xlu0 %1635
      %1639 = vrot.lane.b32.xlu0 %v1599, 48
      %v1640 = vpop.permute.xlu0 %1639
      %1643 = vrot.lane.b32.xlu0 %v1590, 64
      %v1644 = vpop.permute.xlu0 %1643
      %1647 = vrot.lane.b32.xlu0 %v1600, 80
      %v1648 = vpop.permute.xlu0 %1647
      %1651 = vrot.lane.b32.xlu0 %v1597, 96
      %v1652 = vpop.permute.xlu0 %1651
      %1655 = vrot.lane.b32.xlu0 %v1601, 112
      %v1656 = vpop.permute.xlu0 %1655
      %v1658 = vsel %vm227, %v1506, %v1604
      %v1659 = vsel %vm716, %v1658, %v1608
      %v1660 = vsel %vm718, %v1659, %v1612
      %v1661 = vsel %vm720, %v1660, %v1616
      %v1662 = vsel %vm722, %v1661, %v1620
      %v1663 = vsel %vm724, %v1662, %v1624
      %v1664 = vsel %vm726, %v1663, %v1628
      %v1665 = vsel %vm227, %v1574, %v1632
      %v1666 = vsel %vm716, %v1665, %v1636
      %v1667 = vsel %vm718, %v1666, %v1640
      %v1668 = vsel %vm720, %v1667, %v1644
      %v1669 = vsel %vm722, %v1668, %v1648
      %v1670 = vsel %vm724, %v1669, %v1652
      %v1671 = vsel %vm726, %v1670, %v1656
      %1672 = vrot.lane.b32.xlu0 %v1210, 126
      %v1673 = vpop.permute.xlu0 %1672
      %1674 = vrot.lane.b32.xlu0 %v1212, 126
      %v1675 = vpop.permute.xlu0 %1674
      %1676 = vrot.lane.b32.xlu0 %v1215, 126
      %v1677 = vpop.permute.xlu0 %1676
      %1678 = vrot.lane.b32.xlu0 %v1217, 126
      %v1679 = vpop.permute.xlu0 %1678
      %1680 = vrot.lane.b32.xlu0 %v1220, 126
      %v1681 = vpop.permute.xlu0 %1680
      %1682 = vrot.lane.b32.xlu0 %v1222, 126
      %v1683 = vpop.permute.xlu0 %1682
      %1684 = vrot.lane.b32.xlu0 %v1225, 126
      %v1685 = vpop.permute.xlu0 %1684
      %1686 = vrot.lane.b32.xlu0 %v1227, 126
      %v1687 = vpop.permute.xlu0 %1686
      %v1696 = vcombine.low %v1673, %v1681
      %v1697 = vcombine.high %v1673, %v1681
      %v1699 = vunpack.c.l.s4 1983009808
      %v1700 = vunpack.c.0.s8 %v1699
      %v1701 = vlaneseq
      %v1702 = vshrl.u32 %v1701, 7
      %v1703 = vsub.s32 %v1700, %v1702
      %v1704 = vrot.slane %v1696, %v1703
      %v1706 = vunpack.c.l.s4 1983009808
      %v1707 = vunpack.c.0.s8 %v1706
      %v1708 = vlaneseq
      %v1709 = vshrl.u32 %v1708, 7
      %v1710 = vsub.s32 %v1707, %v1709
      %v1711 = vrot.slane %v1697, %v1710
      %v1712 = vcombine.low %v1677, %v1685
      %v1713 = vcombine.high %v1677, %v1685
      %v1715 = vunpack.c.l.s4 1983009808
      %v1716 = vunpack.c.0.s8 %v1715
      %v1717 = vlaneseq
      %v1718 = vshrl.u32 %v1717, 7
      %v1719 = vsub.s32 %v1716, %v1718
      %v1720 = vrot.slane %v1712, %v1719
      %v1722 = vunpack.c.l.s4 1983009808
      %v1723 = vunpack.c.0.s8 %v1722
      %v1724 = vlaneseq
      %v1725 = vshrl.u32 %v1724, 7
      %v1726 = vsub.s32 %v1723, %v1725
      %v1727 = vrot.slane %v1713, %v1726
      %v1728 = vcombine.low %v1704, %v1720
      %v1729 = vcombine.high %v1704, %v1720
      %v1731 = vunpack.c.l.s4 1934713408
      %v1732 = vunpack.c.0.s8 %v1731
      %v1733 = vlaneseq
      %v1734 = vshrl.u32 %v1733, 7
      %v1735 = vsub.s32 %v1732, %v1734
      %v1736 = vrot.slane %v1728, %v1735
      %v1738 = vunpack.c.l.s4 1934713408
      %v1739 = vunpack.c.0.s8 %v1738
      %v1740 = vlaneseq
      %v1741 = vshrl.u32 %v1740, 7
      %v1742 = vsub.s32 %v1739, %v1741
      %v1743 = vrot.slane %v1729, %v1742
      %v1744 = vcombine.low %v1711, %v1727
      %v1745 = vcombine.high %v1711, %v1727
      %v1747 = vunpack.c.l.s4 1934713408
      %v1748 = vunpack.c.0.s8 %v1747
      %v1749 = vlaneseq
      %v1750 = vshrl.u32 %v1749, 7
      %v1751 = vsub.s32 %v1748, %v1750
      %v1752 = vrot.slane %v1744, %v1751
      %v1754 = vunpack.c.l.s4 1934713408
      %v1755 = vunpack.c.0.s8 %v1754
      %v1756 = vlaneseq
      %v1757 = vshrl.u32 %v1756, 7
      %v1758 = vsub.s32 %v1755, %v1757
      %v1759 = vrot.slane %v1745, %v1758
      %v1760 = vcombine.high %v1736, 0.0
      %v1761 = vcombine.high %v1743, 0.0
      %v1762 = vcombine.high %v1752, 0.0
      %v1763 = vcombine.high %v1759, 0.0
      %v1764 = vcombine.low %v1675, %v1683
      %v1765 = vcombine.high %v1675, %v1683
      %v1767 = vunpack.c.l.s4 1983009808
      %v1768 = vunpack.c.0.s8 %v1767
      %v1769 = vlaneseq
      %v1770 = vshrl.u32 %v1769, 7
      %v1771 = vsub.s32 %v1768, %v1770
      %v1772 = vrot.slane %v1764, %v1771
      %v1774 = vunpack.c.l.s4 1983009808
      %v1775 = vunpack.c.0.s8 %v1774
      %v1776 = vlaneseq
      %v1777 = vshrl.u32 %v1776, 7
      %v1778 = vsub.s32 %v1775, %v1777
      %v1779 = vrot.slane %v1765, %v1778
      %v1780 = vcombine.low %v1679, %v1687
      %v1781 = vcombine.high %v1679, %v1687
      %v1783 = vunpack.c.l.s4 1983009808
      %v1784 = vunpack.c.0.s8 %v1783
      %v1785 = vlaneseq
      %v1786 = vshrl.u32 %v1785, 7
      %v1787 = vsub.s32 %v1784, %v1786
      %v1788 = vrot.slane %v1780, %v1787
      %v1790 = vunpack.c.l.s4 1983009808
      %v1791 = vunpack.c.0.s8 %v1790
      %v1792 = vlaneseq
      %v1793 = vshrl.u32 %v1792, 7
      %v1794 = vsub.s32 %v1791, %v1793
      %v1795 = vrot.slane %v1781, %v1794
      %v1796 = vcombine.low %v1772, %v1788
      %v1797 = vcombine.high %v1772, %v1788
      %v1799 = vunpack.c.l.s4 1934713408
      %v1800 = vunpack.c.0.s8 %v1799
      %v1801 = vlaneseq
      %v1802 = vshrl.u32 %v1801, 7
      %v1803 = vsub.s32 %v1800, %v1802
      %v1804 = vrot.slane %v1796, %v1803
      %v1806 = vunpack.c.l.s4 1934713408
      %v1807 = vunpack.c.0.s8 %v1806
      %v1808 = vlaneseq
      %v1809 = vshrl.u32 %v1808, 7
      %v1810 = vsub.s32 %v1807, %v1809
      %v1811 = vrot.slane %v1797, %v1810
      %v1812 = vcombine.low %v1779, %v1795
      %v1813 = vcombine.high %v1779, %v1795
      %v1815 = vunpack.c.l.s4 1934713408
      %v1816 = vunpack.c.0.s8 %v1815
      %v1817 = vlaneseq
      %v1818 = vshrl.u32 %v1817, 7
      %v1819 = vsub.s32 %v1816, %v1818
      %v1820 = vrot.slane %v1812, %v1819
      %v1822 = vunpack.c.l.s4 1934713408
      %v1823 = vunpack.c.0.s8 %v1822
      %v1824 = vlaneseq
      %v1825 = vshrl.u32 %v1824, 7
      %v1826 = vsub.s32 %v1823, %v1825
      %v1827 = vrot.slane %v1813, %v1826
      %v1828 = vcombine.high %v1804, 0.0
      %v1829 = vcombine.high %v1811, 0.0
      %v1830 = vcombine.high %v1820, 0.0
      %v1831 = vcombine.high %v1827, 0.0
      %1833 = vrot.lane.b32.xlu0 %v1760, 16
      %v1834 = vpop.permute.xlu0 %1833
      %1837 = vrot.lane.b32.xlu0 %v1743, 32
      %v1838 = vpop.permute.xlu0 %1837
      %1841 = vrot.lane.b32.xlu0 %v1761, 48
      %v1842 = vpop.permute.xlu0 %1841
      %1845 = vrot.lane.b32.xlu0 %v1752, 64
      %v1846 = vpop.permute.xlu0 %1845
      %1849 = vrot.lane.b32.xlu0 %v1762, 80
      %v1850 = vpop.permute.xlu0 %1849
      %1853 = vrot.lane.b32.xlu0 %v1759, 96
      %v1854 = vpop.permute.xlu0 %1853
      %1857 = vrot.lane.b32.xlu0 %v1763, 112
      %v1858 = vpop.permute.xlu0 %1857
      %1861 = vrot.lane.b32.xlu0 %v1828, 16
      %v1862 = vpop.permute.xlu0 %1861
      %1865 = vrot.lane.b32.xlu0 %v1811, 32
      %v1866 = vpop.permute.xlu0 %1865
      %1869 = vrot.lane.b32.xlu0 %v1829, 48
      %v1870 = vpop.permute.xlu0 %1869
      %1873 = vrot.lane.b32.xlu0 %v1820, 64
      %v1874 = vpop.permute.xlu0 %1873
      %1877 = vrot.lane.b32.xlu0 %v1830, 80
      %v1878 = vpop.permute.xlu0 %1877
      %1881 = vrot.lane.b32.xlu0 %v1827, 96
      %v1882 = vpop.permute.xlu0 %1881
      %1885 = vrot.lane.b32.xlu0 %v1831, 112
      %v1886 = vpop.permute.xlu0 %1885
      %v1888 = vsel %vm227, %v1736, %v1834
      %v1889 = vsel %vm716, %v1888, %v1838
      %v1890 = vsel %vm718, %v1889, %v1842
      %v1891 = vsel %vm720, %v1890, %v1846
      %v1892 = vsel %vm722, %v1891, %v1850
      %v1893 = vsel %vm724, %v1892, %v1854
      %v1894 = vsel %vm726, %v1893, %v1858
      %v1895 = vsel %vm227, %v1804, %v1862
      %v1896 = vsel %vm716, %v1895, %v1866
      %v1897 = vsel %vm718, %v1896, %v1870
      %v1898 = vsel %vm720, %v1897, %v1874
      %v1899 = vsel %vm722, %v1898, %v1878
      %v1900 = vsel %vm724, %v1899, %v1882
      %v1901 = vsel %vm726, %v1900, %v1886
      %vm1902 = vcmask 1045504
      %v1903 = vrot.slane %v511, 2
      %v1904 = vrot.slane %v512, 2
      %v1905 = vsel %vm1902, %v1903, %v1904
      %v1906 = vrot.slane %v513, 2
      %v1907 = vsel %vm1902, %v1904, %v1906
      %v1908 = vrot.slane %v514, 2
      %v1909 = vrot.slane %v515, 2
      %v1910 = vsel %vm1902, %v1908, %v1909
      %v1911 = vrot.slane %v516, 2
      %v1912 = vsel %vm1902, %v1909, %v1911
      %v1913 = vrot.slane %v517, 2
      %v1914 = vrot.slane %v518, 2
      %v1915 = vsel %vm1902, %v1913, %v1914
      %v1916 = vrot.slane %v519, 2
      %v1917 = vsel %vm1902, %v1914, %v1916
      %v1918 = vrot.slane %v520, 2
      %v1919 = vrot.slane %v521, 2
      %v1920 = vsel %vm1902, %v1918, %v1919
      %v1921 = vrot.slane %v522, 2
      %v1922 = vsel %vm1902, %v1919, %v1921
      %v1931 = vcombine.low %v1905, %v1915
      %v1932 = vcombine.high %v1905, %v1915
      %v1934 = vunpack.c.l.s4 1983009808
      %v1935 = vunpack.c.0.s8 %v1934
      %v1936 = vlaneseq
      %v1937 = vshrl.u32 %v1936, 7
      %v1938 = vsub.s32 %v1935, %v1937
      %v1939 = vrot.slane %v1931, %v1938
      %v1941 = vunpack.c.l.s4 1983009808
      %v1942 = vunpack.c.0.s8 %v1941
      %v1943 = vlaneseq
      %v1944 = vshrl.u32 %v1943, 7
      %v1945 = vsub.s32 %v1942, %v1944
      %v1946 = vrot.slane %v1932, %v1945
      %v1947 = vcombine.low %v1910, %v1920
      %v1948 = vcombine.high %v1910, %v1920
      %v1950 = vunpack.c.l.s4 1983009808
      %v1951 = vunpack.c.0.s8 %v1950
      %v1952 = vlaneseq
      %v1953 = vshrl.u32 %v1952, 7
      %v1954 = vsub.s32 %v1951, %v1953
      %v1955 = vrot.slane %v1947, %v1954
      %v1957 = vunpack.c.l.s4 1983009808
      %v1958 = vunpack.c.0.s8 %v1957
      %v1959 = vlaneseq
      %v1960 = vshrl.u32 %v1959, 7
      %v1961 = vsub.s32 %v1958, %v1960
      %v1962 = vrot.slane %v1948, %v1961
      %v1963 = vcombine.low %v1939, %v1955
      %v1964 = vcombine.high %v1939, %v1955
      %v1966 = vunpack.c.l.s4 1934713408
      %v1967 = vunpack.c.0.s8 %v1966
      %v1968 = vlaneseq
      %v1969 = vshrl.u32 %v1968, 7
      %v1970 = vsub.s32 %v1967, %v1969
      %v1971 = vrot.slane %v1963, %v1970
      %v1973 = vunpack.c.l.s4 1934713408
      %v1974 = vunpack.c.0.s8 %v1973
      %v1975 = vlaneseq
      %v1976 = vshrl.u32 %v1975, 7
      %v1977 = vsub.s32 %v1974, %v1976
      %v1978 = vrot.slane %v1964, %v1977
      %v1979 = vcombine.low %v1946, %v1962
      %v1980 = vcombine.high %v1946, %v1962
      %v1982 = vunpack.c.l.s4 1934713408
      %v1983 = vunpack.c.0.s8 %v1982
      %v1984 = vlaneseq
      %v1985 = vshrl.u32 %v1984, 7
      %v1986 = vsub.s32 %v1983, %v1985
      %v1987 = vrot.slane %v1979, %v1986
      %v1989 = vunpack.c.l.s4 1934713408
      %v1990 = vunpack.c.0.s8 %v1989
      %v1991 = vlaneseq
      %v1992 = vshrl.u32 %v1991, 7
      %v1993 = vsub.s32 %v1990, %v1992
      %v1994 = vrot.slane %v1980, %v1993
      %v1995 = vcombine.high %v1971, 0.0
      %v1996 = vcombine.high %v1978, 0.0
      %v1997 = vcombine.high %v1987, 0.0
      %v1998 = vcombine.high %v1994, 0.0
      %v1999 = vcombine.low %v1907, %v1917
      %v2000 = vcombine.high %v1907, %v1917
      %v2002 = vunpack.c.l.s4 1983009808
      %v2003 = vunpack.c.0.s8 %v2002
      %v2004 = vlaneseq
      %v2005 = vshrl.u32 %v2004, 7
      %v2006 = vsub.s32 %v2003, %v2005
      %v2007 = vrot.slane %v1999, %v2006
      %v2009 = vunpack.c.l.s4 1983009808
      %v2010 = vunpack.c.0.s8 %v2009
      %v2011 = vlaneseq
      %v2012 = vshrl.u32 %v2011, 7
      %v2013 = vsub.s32 %v2010, %v2012
      %v2014 = vrot.slane %v2000, %v2013
      %v2015 = vcombine.low %v1912, %v1922
      %v2016 = vcombine.high %v1912, %v1922
      %v2018 = vunpack.c.l.s4 1983009808
      %v2019 = vunpack.c.0.s8 %v2018
      %v2020 = vlaneseq
      %v2021 = vshrl.u32 %v2020, 7
      %v2022 = vsub.s32 %v2019, %v2021
      %v2023 = vrot.slane %v2015, %v2022
      %v2025 = vunpack.c.l.s4 1983009808
      %v2026 = vunpack.c.0.s8 %v2025
      %v2027 = vlaneseq
      %v2028 = vshrl.u32 %v2027, 7
      %v2029 = vsub.s32 %v2026, %v2028
      %v2030 = vrot.slane %v2016, %v2029
      %v2031 = vcombine.low %v2007, %v2023
      %v2032 = vcombine.high %v2007, %v2023
      %v2034 = vunpack.c.l.s4 1934713408
      %v2035 = vunpack.c.0.s8 %v2034
      %v2036 = vlaneseq
      %v2037 = vshrl.u32 %v2036, 7
      %v2038 = vsub.s32 %v2035, %v2037
      %v2039 = vrot.slane %v2031, %v2038
      %v2041 = vunpack.c.l.s4 1934713408
      %v2042 = vunpack.c.0.s8 %v2041
      %v2043 = vlaneseq
      %v2044 = vshrl.u32 %v2043, 7
      %v2045 = vsub.s32 %v2042, %v2044
      %v2046 = vrot.slane %v2032, %v2045
      %v2047 = vcombine.low %v2014, %v2030
      %v2048 = vcombine.high %v2014, %v2030
      %v2050 = vunpack.c.l.s4 1934713408
      %v2051 = vunpack.c.0.s8 %v2050
      %v2052 = vlaneseq
      %v2053 = vshrl.u32 %v2052, 7
      %v2054 = vsub.s32 %v2051, %v2053
      %v2055 = vrot.slane %v2047, %v2054
      %v2057 = vunpack.c.l.s4 1934713408
      %v2058 = vunpack.c.0.s8 %v2057
      %v2059 = vlaneseq
      %v2060 = vshrl.u32 %v2059, 7
      %v2061 = vsub.s32 %v2058, %v2060
      %v2062 = vrot.slane %v2048, %v2061
      %v2063 = vcombine.high %v2039, 0.0
      %v2064 = vcombine.high %v2046, 0.0
      %v2065 = vcombine.high %v2055, 0.0
      %v2066 = vcombine.high %v2062, 0.0
      %2068 = vrot.lane.b32.xlu0 %v1995, 16
      %v2069 = vpop.permute.xlu0 %2068
      %2072 = vrot.lane.b32.xlu0 %v1978, 32
      %v2073 = vpop.permute.xlu0 %2072
      %2076 = vrot.lane.b32.xlu0 %v1996, 48
      %v2077 = vpop.permute.xlu0 %2076
      %2080 = vrot.lane.b32.xlu0 %v1987, 64
      %v2081 = vpop.permute.xlu0 %2080
      %2084 = vrot.lane.b32.xlu0 %v1997, 80
      %v2085 = vpop.permute.xlu0 %2084
      %2088 = vrot.lane.b32.xlu0 %v1994, 96
      %v2089 = vpop.permute.xlu0 %2088
      %2092 = vrot.lane.b32.xlu0 %v1998, 112
      %v2093 = vpop.permute.xlu0 %2092
      %2096 = vrot.lane.b32.xlu0 %v2063, 16
      %v2097 = vpop.permute.xlu0 %2096
      %2100 = vrot.lane.b32.xlu0 %v2046, 32
      %v2101 = vpop.permute.xlu0 %2100
      %2104 = vrot.lane.b32.xlu0 %v2064, 48
      %v2105 = vpop.permute.xlu0 %2104
      %2108 = vrot.lane.b32.xlu0 %v2055, 64
      %v2109 = vpop.permute.xlu0 %2108
      %2112 = vrot.lane.b32.xlu0 %v2065, 80
      %v2113 = vpop.permute.xlu0 %2112
      %2116 = vrot.lane.b32.xlu0 %v2062, 96
      %v2117 = vpop.permute.xlu0 %2116
      %2120 = vrot.lane.b32.xlu0 %v2066, 112
      %v2121 = vpop.permute.xlu0 %2120
      %v2123 = vsel %vm227, %v1971, %v2069
      %v2124 = vsel %vm716, %v2123, %v2073
      %v2125 = vsel %vm718, %v2124, %v2077
      %v2126 = vsel %vm720, %v2125, %v2081
      %v2127 = vsel %vm722, %v2126, %v2085
      %v2128 = vsel %vm724, %v2127, %v2089
      %v2129 = vsel %vm726, %v2128, %v2093
      %v2130 = vsel %vm227, %v2039, %v2097
      %v2131 = vsel %vm716, %v2130, %v2101
      %v2132 = vsel %vm718, %v2131, %v2105
      %v2133 = vsel %vm720, %v2132, %v2109
      %v2134 = vsel %vm722, %v2133, %v2113
      %v2135 = vsel %vm724, %v2134, %v2117
      %v2136 = vsel %vm726, %v2135, %v2121
      %2137 = vrot.lane.b32.xlu0 %v1905, 127
      %v2138 = vpop.permute.xlu0 %2137
      %2139 = vrot.lane.b32.xlu0 %v1907, 127
      %v2140 = vpop.permute.xlu0 %2139
      %2141 = vrot.lane.b32.xlu0 %v1910, 127
      %v2142 = vpop.permute.xlu0 %2141
      %2143 = vrot.lane.b32.xlu0 %v1912, 127
      %v2144 = vpop.permute.xlu0 %2143
      %2145 = vrot.lane.b32.xlu0 %v1915, 127
      %v2146 = vpop.permute.xlu0 %2145
      %2147 = vrot.lane.b32.xlu0 %v1917, 127
      %v2148 = vpop.permute.xlu0 %2147
      %2149 = vrot.lane.b32.xlu0 %v1920, 127
      %v2150 = vpop.permute.xlu0 %2149
      %2151 = vrot.lane.b32.xlu0 %v1922, 127
      %v2152 = vpop.permute.xlu0 %2151
      %v2161 = vcombine.low %v2138, %v2146
      %v2162 = vcombine.high %v2138, %v2146
      %v2164 = vunpack.c.l.s4 1983009808
      %v2165 = vunpack.c.0.s8 %v2164
      %v2166 = vlaneseq
      %v2167 = vshrl.u32 %v2166, 7
      %v2168 = vsub.s32 %v2165, %v2167
      %v2169 = vrot.slane %v2161, %v2168
      %v2171 = vunpack.c.l.s4 1983009808
      %v2172 = vunpack.c.0.s8 %v2171
      %v2173 = vlaneseq
      %v2174 = vshrl.u32 %v2173, 7
      %v2175 = vsub.s32 %v2172, %v2174
      %v2176 = vrot.slane %v2162, %v2175
      %v2177 = vcombine.low %v2142, %v2150
      %v2178 = vcombine.high %v2142, %v2150
      %v2180 = vunpack.c.l.s4 1983009808
      %v2181 = vunpack.c.0.s8 %v2180
      %v2182 = vlaneseq
      %v2183 = vshrl.u32 %v2182, 7
      %v2184 = vsub.s32 %v2181, %v2183
      %v2185 = vrot.slane %v2177, %v2184
      %v2187 = vunpack.c.l.s4 1983009808
      %v2188 = vunpack.c.0.s8 %v2187
      %v2189 = vlaneseq
      %v2190 = vshrl.u32 %v2189, 7
      %v2191 = vsub.s32 %v2188, %v2190
      %v2192 = vrot.slane %v2178, %v2191
      %v2193 = vcombine.low %v2169, %v2185
      %v2194 = vcombine.high %v2169, %v2185
      %v2196 = vunpack.c.l.s4 1934713408
      %v2197 = vunpack.c.0.s8 %v2196
      %v2198 = vlaneseq
      %v2199 = vshrl.u32 %v2198, 7
      %v2200 = vsub.s32 %v2197, %v2199
      %v2201 = vrot.slane %v2193, %v2200
      %v2203 = vunpack.c.l.s4 1934713408
      %v2204 = vunpack.c.0.s8 %v2203
      %v2205 = vlaneseq
      %v2206 = vshrl.u32 %v2205, 7
      %v2207 = vsub.s32 %v2204, %v2206
      %v2208 = vrot.slane %v2194, %v2207
      %v2209 = vcombine.low %v2176, %v2192
      %v2210 = vcombine.high %v2176, %v2192
      %v2212 = vunpack.c.l.s4 1934713408
      %v2213 = vunpack.c.0.s8 %v2212
      %v2214 = vlaneseq
      %v2215 = vshrl.u32 %v2214, 7
      %v2216 = vsub.s32 %v2213, %v2215
      %v2217 = vrot.slane %v2209, %v2216
      %v2219 = vunpack.c.l.s4 1934713408
      %v2220 = vunpack.c.0.s8 %v2219
      %v2221 = vlaneseq
      %v2222 = vshrl.u32 %v2221, 7
      %v2223 = vsub.s32 %v2220, %v2222
      %v2224 = vrot.slane %v2210, %v2223
      %v2225 = vcombine.high %v2201, 0.0
      %v2226 = vcombine.high %v2208, 0.0
      %v2227 = vcombine.high %v2217, 0.0
      %v2228 = vcombine.high %v2224, 0.0
      %v2229 = vcombine.low %v2140, %v2148
      %v2230 = vcombine.high %v2140, %v2148
      %v2232 = vunpack.c.l.s4 1983009808
      %v2233 = vunpack.c.0.s8 %v2232
      %v2234 = vlaneseq
      %v2235 = vshrl.u32 %v2234, 7
      %v2236 = vsub.s32 %v2233, %v2235
      %v2237 = vrot.slane %v2229, %v2236
      %v2239 = vunpack.c.l.s4 1983009808
      %v2240 = vunpack.c.0.s8 %v2239
      %v2241 = vlaneseq
      %v2242 = vshrl.u32 %v2241, 7
      %v2243 = vsub.s32 %v2240, %v2242
      %v2244 = vrot.slane %v2230, %v2243
      %v2245 = vcombine.low %v2144, %v2152
      %v2246 = vcombine.high %v2144, %v2152
      %v2248 = vunpack.c.l.s4 1983009808
      %v2249 = vunpack.c.0.s8 %v2248
      %v2250 = vlaneseq
      %v2251 = vshrl.u32 %v2250, 7
      %v2252 = vsub.s32 %v2249, %v2251
      %v2253 = vrot.slane %v2245, %v2252
      %v2255 = vunpack.c.l.s4 1983009808
      %v2256 = vunpack.c.0.s8 %v2255
      %v2257 = vlaneseq
      %v2258 = vshrl.u32 %v2257, 7
      %v2259 = vsub.s32 %v2256, %v2258
      %v2260 = vrot.slane %v2246, %v2259
      %v2261 = vcombine.low %v2237, %v2253
      %v2262 = vcombine.high %v2237, %v2253
      %v2264 = vunpack.c.l.s4 1934713408
      %v2265 = vunpack.c.0.s8 %v2264
      %v2266 = vlaneseq
      %v2267 = vshrl.u32 %v2266, 7
      %v2268 = vsub.s32 %v2265, %v2267
      %v2269 = vrot.slane %v2261, %v2268
      %v2271 = vunpack.c.l.s4 1934713408
      %v2272 = vunpack.c.0.s8 %v2271
      %v2273 = vlaneseq
      %v2274 = vshrl.u32 %v2273, 7
      %v2275 = vsub.s32 %v2272, %v2274
      %v2276 = vrot.slane %v2262, %v2275
      %v2277 = vcombine.low %v2244, %v2260
      %v2278 = vcombine.high %v2244, %v2260
      %v2280 = vunpack.c.l.s4 1934713408
      %v2281 = vunpack.c.0.s8 %v2280
      %v2282 = vlaneseq
      %v2283 = vshrl.u32 %v2282, 7
      %v2284 = vsub.s32 %v2281, %v2283
      %v2285 = vrot.slane %v2277, %v2284
      %v2287 = vunpack.c.l.s4 1934713408
      %v2288 = vunpack.c.0.s8 %v2287
      %v2289 = vlaneseq
      %v2290 = vshrl.u32 %v2289, 7
      %v2291 = vsub.s32 %v2288, %v2290
      %v2292 = vrot.slane %v2278, %v2291
      %v2293 = vcombine.high %v2269, 0.0
      %v2294 = vcombine.high %v2276, 0.0
      %v2295 = vcombine.high %v2285, 0.0
      %v2296 = vcombine.high %v2292, 0.0
      %2298 = vrot.lane.b32.xlu0 %v2225, 16
      %v2299 = vpop.permute.xlu0 %2298
      %2302 = vrot.lane.b32.xlu0 %v2208, 32
      %v2303 = vpop.permute.xlu0 %2302
      %2306 = vrot.lane.b32.xlu0 %v2226, 48
      %v2307 = vpop.permute.xlu0 %2306
      %2310 = vrot.lane.b32.xlu0 %v2217, 64
      %v2311 = vpop.permute.xlu0 %2310
      %2314 = vrot.lane.b32.xlu0 %v2227, 80
      %v2315 = vpop.permute.xlu0 %2314
      %2318 = vrot.lane.b32.xlu0 %v2224, 96
      %v2319 = vpop.permute.xlu0 %2318
      %2322 = vrot.lane.b32.xlu0 %v2228, 112
      %v2323 = vpop.permute.xlu0 %2322
      %2326 = vrot.lane.b32.xlu0 %v2293, 16
      %v2327 = vpop.permute.xlu0 %2326
      %2330 = vrot.lane.b32.xlu0 %v2276, 32
      %v2331 = vpop.permute.xlu0 %2330
      %2334 = vrot.lane.b32.xlu0 %v2294, 48
      %v2335 = vpop.permute.xlu0 %2334
      %2338 = vrot.lane.b32.xlu0 %v2285, 64
      %v2339 = vpop.permute.xlu0 %2338
      %2342 = vrot.lane.b32.xlu0 %v2295, 80
      %v2343 = vpop.permute.xlu0 %2342
      %2346 = vrot.lane.b32.xlu0 %v2292, 96
      %v2347 = vpop.permute.xlu0 %2346
      %2350 = vrot.lane.b32.xlu0 %v2296, 112
      %v2351 = vpop.permute.xlu0 %2350
      %v2353 = vsel %vm227, %v2201, %v2299
      %v2354 = vsel %vm716, %v2353, %v2303
      %v2355 = vsel %vm718, %v2354, %v2307
      %v2356 = vsel %vm720, %v2355, %v2311
      %v2357 = vsel %vm722, %v2356, %v2315
      %v2358 = vsel %vm724, %v2357, %v2319
      %v2359 = vsel %vm726, %v2358, %v2323
      %v2360 = vsel %vm227, %v2269, %v2327
      %v2361 = vsel %vm716, %v2360, %v2331
      %v2362 = vsel %vm718, %v2361, %v2335
      %v2363 = vsel %vm720, %v2362, %v2339
      %v2364 = vsel %vm722, %v2363, %v2343
      %v2365 = vsel %vm724, %v2364, %v2347
      %v2366 = vsel %vm726, %v2365, %v2351
      %2367 = vrot.lane.b32.xlu0 %v1905, 126
      %v2368 = vpop.permute.xlu0 %2367
      %2369 = vrot.lane.b32.xlu0 %v1907, 126
      %v2370 = vpop.permute.xlu0 %2369
      %2371 = vrot.lane.b32.xlu0 %v1910, 126
      %v2372 = vpop.permute.xlu0 %2371
      %2373 = vrot.lane.b32.xlu0 %v1912, 126
      %v2374 = vpop.permute.xlu0 %2373
      %2375 = vrot.lane.b32.xlu0 %v1915, 126
      %v2376 = vpop.permute.xlu0 %2375
      %2377 = vrot.lane.b32.xlu0 %v1917, 126
      %v2378 = vpop.permute.xlu0 %2377
      %2379 = vrot.lane.b32.xlu0 %v1920, 126
      %v2380 = vpop.permute.xlu0 %2379
      %2381 = vrot.lane.b32.xlu0 %v1922, 126
      %v2382 = vpop.permute.xlu0 %2381
      %v2391 = vcombine.low %v2368, %v2376
      %v2392 = vcombine.high %v2368, %v2376
      %v2394 = vunpack.c.l.s4 1983009808
      %v2395 = vunpack.c.0.s8 %v2394
      %v2396 = vlaneseq
      %v2397 = vshrl.u32 %v2396, 7
      %v2398 = vsub.s32 %v2395, %v2397
      %v2399 = vrot.slane %v2391, %v2398
      %v2401 = vunpack.c.l.s4 1983009808
      %v2402 = vunpack.c.0.s8 %v2401
      %v2403 = vlaneseq
      %v2404 = vshrl.u32 %v2403, 7
      %v2405 = vsub.s32 %v2402, %v2404
      %v2406 = vrot.slane %v2392, %v2405
      %v2407 = vcombine.low %v2372, %v2380
      %v2408 = vcombine.high %v2372, %v2380
      %v2410 = vunpack.c.l.s4 1983009808
      %v2411 = vunpack.c.0.s8 %v2410
      %v2412 = vlaneseq
      %v2413 = vshrl.u32 %v2412, 7
      %v2414 = vsub.s32 %v2411, %v2413
      %v2415 = vrot.slane %v2407, %v2414
      %v2417 = vunpack.c.l.s4 1983009808
      %v2418 = vunpack.c.0.s8 %v2417
      %v2419 = vlaneseq
      %v2420 = vshrl.u32 %v2419, 7
      %v2421 = vsub.s32 %v2418, %v2420
      %v2422 = vrot.slane %v2408, %v2421
      %v2423 = vcombine.low %v2399, %v2415
      %v2424 = vcombine.high %v2399, %v2415
      %v2426 = vunpack.c.l.s4 1934713408
      %v2427 = vunpack.c.0.s8 %v2426
      %v2428 = vlaneseq
      %v2429 = vshrl.u32 %v2428, 7
      %v2430 = vsub.s32 %v2427, %v2429
      %v2431 = vrot.slane %v2423, %v2430
      %v2433 = vunpack.c.l.s4 1934713408
      %v2434 = vunpack.c.0.s8 %v2433
      %v2435 = vlaneseq
      %v2436 = vshrl.u32 %v2435, 7
      %v2437 = vsub.s32 %v2434, %v2436
      %v2438 = vrot.slane %v2424, %v2437
      %v2439 = vcombine.low %v2406, %v2422
      %v2440 = vcombine.high %v2406, %v2422
      %v2442 = vunpack.c.l.s4 1934713408
      %v2443 = vunpack.c.0.s8 %v2442
      %v2444 = vlaneseq
      %v2445 = vshrl.u32 %v2444, 7
      %v2446 = vsub.s32 %v2443, %v2445
      %v2447 = vrot.slane %v2439, %v2446
      %v2449 = vunpack.c.l.s4 1934713408
      %v2450 = vunpack.c.0.s8 %v2449
      %v2451 = vlaneseq
      %v2452 = vshrl.u32 %v2451, 7
      %v2453 = vsub.s32 %v2450, %v2452
      %v2454 = vrot.slane %v2440, %v2453
      %v2455 = vcombine.high %v2431, 0.0
      %v2456 = vcombine.high %v2438, 0.0
      %v2457 = vcombine.high %v2447, 0.0
      %v2458 = vcombine.high %v2454, 0.0
      %v2459 = vcombine.low %v2370, %v2378
      %v2460 = vcombine.high %v2370, %v2378
      %v2462 = vunpack.c.l.s4 1983009808
      %v2463 = vunpack.c.0.s8 %v2462
      %v2464 = vlaneseq
      %v2465 = vshrl.u32 %v2464, 7
      %v2466 = vsub.s32 %v2463, %v2465
      %v2467 = vrot.slane %v2459, %v2466
      %v2469 = vunpack.c.l.s4 1983009808
      %v2470 = vunpack.c.0.s8 %v2469
      %v2471 = vlaneseq
      %v2472 = vshrl.u32 %v2471, 7
      %v2473 = vsub.s32 %v2470, %v2472
      %v2474 = vrot.slane %v2460, %v2473
      %v2475 = vcombine.low %v2374, %v2382
      %v2476 = vcombine.high %v2374, %v2382
      %v2478 = vunpack.c.l.s4 1983009808
      %v2479 = vunpack.c.0.s8 %v2478
      %v2480 = vlaneseq
      %v2481 = vshrl.u32 %v2480, 7
      %v2482 = vsub.s32 %v2479, %v2481
      %v2483 = vrot.slane %v2475, %v2482
      %v2485 = vunpack.c.l.s4 1983009808
      %v2486 = vunpack.c.0.s8 %v2485
      %v2487 = vlaneseq
      %v2488 = vshrl.u32 %v2487, 7
      %v2489 = vsub.s32 %v2486, %v2488
      %v2490 = vrot.slane %v2476, %v2489
      %v2491 = vcombine.low %v2467, %v2483
      %v2492 = vcombine.high %v2467, %v2483
      %v2494 = vunpack.c.l.s4 1934713408
      %v2495 = vunpack.c.0.s8 %v2494
      %v2496 = vlaneseq
      %v2497 = vshrl.u32 %v2496, 7
      %v2498 = vsub.s32 %v2495, %v2497
      %v2499 = vrot.slane %v2491, %v2498
      %v2501 = vunpack.c.l.s4 1934713408
      %v2502 = vunpack.c.0.s8 %v2501
      %v2503 = vlaneseq
      %v2504 = vshrl.u32 %v2503, 7
      %v2505 = vsub.s32 %v2502, %v2504
      %v2506 = vrot.slane %v2492, %v2505
      %v2507 = vcombine.low %v2474, %v2490
      %v2508 = vcombine.high %v2474, %v2490
      %v2510 = vunpack.c.l.s4 1934713408
      %v2511 = vunpack.c.0.s8 %v2510
      %v2512 = vlaneseq
      %v2513 = vshrl.u32 %v2512, 7
      %v2514 = vsub.s32 %v2511, %v2513
      %v2515 = vrot.slane %v2507, %v2514
      %v2517 = vunpack.c.l.s4 1934713408
      %v2518 = vunpack.c.0.s8 %v2517
      %v2519 = vlaneseq
      %v2520 = vshrl.u32 %v2519, 7
      %v2521 = vsub.s32 %v2518, %v2520
      %v2522 = vrot.slane %v2508, %v2521
      %v2523 = vcombine.high %v2499, 0.0
      %v2524 = vcombine.high %v2506, 0.0
      %v2525 = vcombine.high %v2515, 0.0
      %v2526 = vcombine.high %v2522, 0.0
      %2528 = vrot.lane.b32.xlu0 %v2455, 16
      %v2529 = vpop.permute.xlu0 %2528
      %2532 = vrot.lane.b32.xlu0 %v2438, 32
      %v2533 = vpop.permute.xlu0 %2532
      %2536 = vrot.lane.b32.xlu0 %v2456, 48
      %v2537 = vpop.permute.xlu0 %2536
      %2540 = vrot.lane.b32.xlu0 %v2447, 64
      %v2541 = vpop.permute.xlu0 %2540
      %2544 = vrot.lane.b32.xlu0 %v2457, 80
      %v2545 = vpop.permute.xlu0 %2544
      %2548 = vrot.lane.b32.xlu0 %v2454, 96
      %v2549 = vpop.permute.xlu0 %2548
      %2552 = vrot.lane.b32.xlu0 %v2458, 112
      %v2553 = vpop.permute.xlu0 %2552
      %2556 = vrot.lane.b32.xlu0 %v2523, 16
      %v2557 = vpop.permute.xlu0 %2556
      %2560 = vrot.lane.b32.xlu0 %v2506, 32
      %v2561 = vpop.permute.xlu0 %2560
      %2564 = vrot.lane.b32.xlu0 %v2524, 48
      %v2565 = vpop.permute.xlu0 %2564
      %2568 = vrot.lane.b32.xlu0 %v2515, 64
      %v2569 = vpop.permute.xlu0 %2568
      %2572 = vrot.lane.b32.xlu0 %v2525, 80
      %v2573 = vpop.permute.xlu0 %2572
      %2576 = vrot.lane.b32.xlu0 %v2522, 96
      %v2577 = vpop.permute.xlu0 %2576
      %2580 = vrot.lane.b32.xlu0 %v2526, 112
      %v2581 = vpop.permute.xlu0 %2580
      %v2583 = vsel %vm227, %v2431, %v2529
      %v2584 = vsel %vm716, %v2583, %v2533
      %v2585 = vsel %vm718, %v2584, %v2537
      %v2586 = vsel %vm720, %v2585, %v2541
      %v2587 = vsel %vm722, %v2586, %v2545
      %v2588 = vsel %vm724, %v2587, %v2549
      %v2589 = vsel %vm726, %v2588, %v2553
      %v2590 = vsel %vm227, %v2499, %v2557
      %v2591 = vsel %vm716, %v2590, %v2561
      %v2592 = vsel %vm718, %v2591, %v2565
      %v2593 = vsel %vm720, %v2592, %v2569
      %v2594 = vsel %vm722, %v2593, %v2573
      %v2595 = vsel %vm724, %v2594, %v2577
      %v2596 = vsel %vm726, %v2595, %v2581
      %v2599 = vrot.slane %v965, 4
      %v2600 = vrot.slane %v972, 4
      %v2605 = vrot.slane %v1434, 4
      %v2606 = vrot.slane %v1441, 4
      %v2611 = vrot.slane %v1894, 4
      %v2612 = vrot.slane %v1901, 4
      %v2617 = vrot.slane %v2359, 4
      %v2618 = vrot.slane %v2366, 4
      %vm2621 = vcmask 1043456
      %v2622 = vsel %vm2621, %v727, %v2599
      %v2623 = vsel %vm2621, %v734, %v2600
      %v2624 = vsel %vm2621, %v1195, %v2605
      %v2625 = vsel %vm2621, %v1202, %v2606
      %v2626 = vsel %vm2621, %v1664, %v2611
      %v2627 = vsel %vm2621, %v1671, %v2612
      %v2628 = vsel %vm2621, %v2129, %v2617
      %v2629 = vsel %vm2621, %v2136, %v2618
      %v2630 = vld [vmem:[%s2] sm:$0xf]
      %v2631 = vld [vmem:[%s3] sm:$0xf]
      %2633 = vset.pattern.permute.xlu0 0
      %2634 = vperm.xlu0 %2633, %v2631
      %v2635 = vpop.permute.xlu0 %2634
      %vm2637 = vcmask 293888
      %v2639 = vsel %vm2637, %v2630, 0
      %v2642 = vsel %vm2621, %v2589, 0
      %v2645 = vsel %vm2621, %v2596, 0
      %2647 = vmatprep.subr.mxu0 %v2623
      %2648 = vmatpush1.msra.mxu0 %v2622
      %2649 = vmatprep.subr.mxu0 %v2625
      %2650 = vmatpush1.msra.mxu0 %v2624
      %2651 = vmatprep.subr.mxu0 %v2627
      %2652 = vmatpush1.msra.mxu0 %v2626
      %2653 = vmatprep.subr.mxu0 %v2629
      %2654 = vmatpush1.msra.mxu0 %v2628
      %2655 = vmatprep.subr.mxu0 %v2645
      %2656 = vmatpush1.msra.mxu0 %v2642
      %2657 = vmatprep.subr.mxu0 0.0
      %2658 = vmatpush1.msra.mxu0 0.0
      %2659 = vmatprep.subr.mxu0 0.0
      %2660 = vmatpush1.msra.mxu0 0.0
      %2661 = vmatprep.subr.mxu0 0.0
      %2662 = vmatpush1.msra.mxu0 0.0
      %2663 = vmatprep.subr.mxu0 0.0
      %2664 = vmatpush1.msra.mxu0 0.0
      %2665 = vmatprep.subr.mxu0 0.0
      %2666 = vmatpush1.msra.mxu0 0.0
      %2667 = vmatprep.subr.mxu0 0.0
      %2668 = vmatpush1.msra.mxu0 0.0
      %2669 = vmatprep.subr.mxu0 0.0
      %2670 = vmatpush1.msra.mxu0 0.0
      %2671 = vmatprep.subr.mxu0 0.0
      %2672 = vmatpush1.msra.mxu0 0.0
      %2673 = vmatprep.subr.mxu0 0.0
      %2674 = vmatpush1.msra.mxu0 0.0
      %2675 = vmatprep.subr.mxu0 0.0
      %2676 = vmatpush1.msra.mxu0 0.0
      %2677 = vmatprep.subr.mxu0 0.0
      %2678 = vmatpush1.msra.mxu0 0.0
      %2679 = vmatprep.subr.mxu0 0.0
      %2680 = vmatpush1.msra.mxu0 0.0
      %2681 = vmatprep.subr.mxu0 0.0
      %2682 = vmatpush1.msra.mxu0 0.0
      %2683 = vmatprep.subr.mxu0 0.0
      %2684 = vmatpush1.msra.mxu0 0.0
      %2685 = vmatprep.subr.mxu0 0.0
      %2686 = vmatpush1.msra.mxu0 0.0
      %2687 = vmatprep.subr.mxu0 0.0
      %2688 = vmatpush1.msra.mxu0 0.0
      %2689 = vmatprep.subr.mxu0 0.0
      %2690 = vmatpush1.msra.mxu0 0.0
      %2691 = vmatprep.subr.mxu0 0.0
      %2692 = vmatpush1.msra.mxu0 0.0
      %2693 = vmatprep.subr.mxu0 0.0
      %2694 = vmatpush1.msra.mxu0 0.0
      %2695 = vmatprep.subr.mxu0 0.0
      %2696 = vmatpush1.msra.mxu0 0.0
      %2697 = vmatprep.subr.mxu0 0.0
      %2698 = vmatpush1.msra.mxu0 0.0
      %2699 = vmatprep.subr.mxu0 0.0
      %2700 = vmatpush1.msra.mxu0 0.0
      %2701 = vmatprep.subr.mxu0 0.0
      %2702 = vmatpush1.msra.mxu0 0.0
      %2703 = vmatprep.subr.mxu0 0.0
      %2704 = vmatpush1.msra.mxu0 0.0
      %2705 = vmatprep.subr.mxu0 0.0
      %2706 = vmatpush1.msra.mxu0 0.0
      %2707 = vmatprep.subr.mxu0 0.0
      %2708 = vmatpush1.msra.mxu0 0.0
      %2709 = vmatprep.subr.mxu0 0.0
      %2710 = vmatpush1.msra.mxu0 0.0
      %2711 = vmatprep.mubr.f32.mxu0 0.0
      %2712 = vmatmul.mubr.f32.gmra.mrb[0].mxu0 %v2639
      %v2713 = vpop.f32.mrb[0].mxu0
      %v2714 = vadd.f32 %v2635, %v2713
      %v2715 = vpop.f32.mrb[0].mxu0
      %v2716 = vadd.f32 %v2635, %v2715
      %2717 = vdwg.mxu0
      %v2720 = vcombine.low %v2714, %v2716
      %v2722 = vadd.f32 %v218, %v2720
      %2723 = vst [vmem:[%s217] sm:$0xff] %v2722
      %p2724 = scmp.lt.s32.totalorder %s15, 1
      %s2725 = scalar_select %p2724, %s15, 1
      %s2726 = smul.addr %s2725, 2
      %s2727 = smul.addr %s2726, 4
      %s2728 = scalar_lea.vmem %s4, %s2727
      // Predicated region
      $region37: #{fam_forward.1} parent=35 // pred_check
        %p2729 = pneg %p127
      $region38: #{fam_forward.1} parent=35 // pred_check_branch
        %2731 = sbr.rel (%p2729) target = $region40
      $region39: #{fam_forward.1} parent=35 // pred_region
        _
      $region40: #{fam_forward.1} parent=35 // pred_fallthru
        _
    $region36: #{fam_forward.1} parent=5 // pred_fallthru
      _
    %p2732 = scmp.le.s32.totalorder 2, %s10
    // Predicated region
    $region41: #{fam_forward.1} parent=5 // pred_check
      %p2733 = pneg %p2732
    $region42: #{fam_forward.1} parent=5 // pred_check_branch
      %2735 = sbr.rel (%p2733) target = $region44
    $region43: #{fam_forward.1} parent=5 // pred_region
      %s2736 = ssub.s32 %s10, 2
      // Predicated region
      $region45: #{fam_forward.1} parent=43 // pred_check
        %p2737 = pneg %p133
      $region46: #{fam_forward.1} parent=43 // pred_check_branch
        %2739 = sbr.rel (%p2737) target = $region48
      $region47: #{fam_forward.1} parent=43 // pred_region
        %p2740 = scmp.lt.s32.totalorder %s16, 1
        %s2741 = scalar_select %p2740, %s16, 1
        %s2742 = smul.addr %s2741, 2
        %s2743 = smul.addr %s2742, 4
        %s2744 = scalar_lea.vmem %s4, %s2743
      $region48: #{fam_forward.1} parent=43 // pred_fallthru
        _
    $region44: #{fam_forward.1} parent=5 // pred_fallthru
      _
  $region6: #{fam_forward.1} parent=0 // loop_footer
    %s14 = sadd.s32 1, %s10
  $region7: #{fam_forward.1} parent=0 // loop_footer_branch
    %9 = sbr.rel target = $region3
  $region8: #{fam_forward.1} parent=0 // loop_exit
    _

</llo_original>
